<compile_context>
chip_gen: v7x
topology: tpu7x:2x2x1
jax: 0.10.0
libtpu: 0.0.40
codegen_flags: <defaults>
</compile_context>

<pallas_src>
import numpy as np

import jax
import jax.numpy as jnp
from jax import lax
from jax.experimental import pallas as pl
from jax.experimental.pallas import tpu as pltpu


def _round_up(n, m):
    return ((n + m - 1) // m) * m


# ---------------------------------------------------------------------------
# Fused kernel: whole forward for `bb` samples per grid step
# ---------------------------------------------------------------------------

def _make_fused_kernel(bb, n_tap2, pos2_pad, pos2):
    def kernel(x_ref, w1_ref, b1_ref, s1_ref, t1_ref,
               w2_ref, b2_ref, s2_ref, t2_ref,
               wf1_ref, bf1_ref, wf2_ref, bf2_ref, o_ref):
        # Weights / per-channel vectors are VMEM-resident across the grid (their
        # index_maps always return block 0) -- load once per step.
        w1 = w1_ref[...]
        b1 = b1_ref[...]; s1 = s1_ref[...]; t1 = t1_ref[...]
        b2 = b2_ref[...]; s2 = s2_ref[...]; t2 = t2_ref[...]
        bf1 = bf1_ref[...]; wf2 = wf2_ref[...]; bf2 = bf2_ref[...]

        for smp in range(bb):  # static unroll over samples in this block
            # ---- conv1 -> ReLU -> BatchNorm1 : one MXU matmul over all patch rows ---
            p1 = x_ref[smp]                                         # (rows, Cin*k1*k1)
            h1 = jnp.dot(p1, w1, preferred_element_type=jnp.float32)
            h1 = jnp.maximum(h1 + b1, 0.0) * s1 + t1                # (rows, C1)

            # ---- conv2 -> ReLU -> BatchNorm2 : in-kernel patch use; each tap is a
            #      contiguous sublane-aligned block of pos2_pad rows -----------------
            acc2 = None
            for t in range(n_tap2):
                blk = h1[t * pos2_pad:(t + 1) * pos2_pad, :]        # (pos2_pad, C1)
                part = jnp.dot(blk, w2_ref[t], preferred_element_type=jnp.float32)
                acc2 = part if acc2 is None else acc2 + part
            y2 = jnp.maximum(acc2 + b2, 0.0) * s2 + t2              # (pos2_pad, C2)
            # rows >= pos2 are alignment padding (finite garbage, never read below)

            # ---- flatten + fc1 -> ReLU : fc1 weights were permuted at trace time to
            #      (position, channel, out) so no in-kernel reshape is needed ---------
            hf = None
            for p in range(pos2):
                part = jnp.dot(y2[p:p + 1, :], wf1_ref[p],
                               preferred_element_type=jnp.float32)  # (1, F1)
                hf = part if hf is None else hf + part
            hf = jnp.maximum(hf + bf1, 0.0)                         # (1, F1)

            # ---- fc2 (F1 -> 1) on the VPU: multiply + lane reduction ----------------
            val = jnp.sum(hf * wf2, axis=-1, keepdims=True) + bf2   # (1, 1)
            o_ref[smp] = val

    return kernel


# ---------------------------------------------------------------------------
# Wrapper-side conv1 im2col, pre-ordered for in-kernel conv2 patch extraction
# ---------------------------------------------------------------------------

def _conv1_patches_conv2_tap_major(x, k1, s1, k2, s2, pos2_pad):
    """Returns (B, k2*k2*pos2_pad, Cin*k1*k1) patches.

    Row index = tap2 * pos2_pad + (i2*ow2 + j2): the conv1 patch feeding conv1-output
    position (s2*i2 + kh2, s2*j2 + kw2), i.e. exactly the pixel conv2 tap (kh2, kw2)
    needs for its output position (i2, j2).  Feature order = (Cin, kh1, kw1), matching
    PyTorch's weight.reshape(Cout, -1).  This is the single wrapper-side data-movement
    pass; everything downstream happens inside one kernel."""
    B, C, H, W = x.shape
    oh1 = (H - k1) // s1 + 1
    ow1 = (W - k1) // s1 + 1
    oh2 = (oh1 - k2) // s2 + 1
    ow2 = (ow1 - k2) // s2 + 1
    pos2 = oh2 * ow2

    slabs = []
    for kh in range(k1):
        for kw in range(k1):
            slabs.append(x[:, :, kh:kh + s1 * (oh1 - 1) + 1:s1,
                               kw:kw + s1 * (ow1 - 1) + 1:s1])       # (B, C, oh1, ow1)
    p = jnp.stack(slabs, axis=2)                    # (B, C, k1*k1, oh1, ow1)
    p = p.transpose(0, 3, 4, 1, 2)                  # (B, oh1, ow1, C, k1*k1)
    p = p.reshape(B, oh1 * ow1, C * k1 * k1)

    idx = np.zeros((k2 * k2, pos2_pad), np.int32)
    valid = np.zeros((k2 * k2, pos2_pad, 1), np.float32)
    for kh2 in range(k2):
        for kw2 in range(k2):
            t = kh2 * k2 + kw2
            for i2 in range(oh2):
                for j2 in range(ow2):
                    idx[t, i2 * ow2 + j2] = (s2 * i2 + kh2) * ow1 + (s2 * j2 + kw2)
                    valid[t, i2 * ow2 + j2, 0] = 1.0
    g = p[:, jnp.asarray(idx.reshape(-1)), :]       # (B, k2*k2*pos2_pad, Cin*k1*k1)
    g = g * jnp.asarray(valid.reshape(1, -1, 1))    # zero alignment-padding rows
    return g


# ---------------------------------------------------------------------------
# Fused forward (single pallas_call)
# ---------------------------------------------------------------------------

def sac_value_forward_pallas(x, params, conv_strides=(2, 2), samples_per_block=None):
    s1, s2 = conv_strides
    B, C, H, W = x.shape
    c1, _, k1, _ = params["conv1_w"].shape
    c2, _, k2, _ = params["conv2_w"].shape
    oh1, ow1 = (H - k1) // s1 + 1, (W - k1) // s1 + 1
    oh2, ow2 = (oh1 - k2) // s2 + 1, (ow1 - k2) // s2 + 1
    n_tap2 = k2 * k2
    pos2 = oh2 * ow2
    pos2_pad = _round_up(pos2, 8)              # sublane-aligned conv2 tap blocks
    feat1 = C * k1 * k1
    n_rows = n_tap2 * pos2_pad
    f1_out = params["fc1_w"].shape[0]
    f2_out = params["fc2_w"].shape[0]
    assert params["fc1_w"].shape[1] == c2 * pos2, "fc1 input size mismatch with conv stack"
    # TODO(synk): generalize the fc2 VPU reduction to out_features > 1 (config uses 1).
    assert f2_out == 1, "fused kernel implements the value-head case fc2 out_features == 1"

    eps = 1e-5
    f32 = jnp.float32

    # ---- trace-time weight re-layout (tiny constants; permute weights instead of
    #      relayout-ing activations) ----
    w1 = params["conv1_w"].reshape(c1, feat1).T.astype(f32)                 # (feat1, C1)
    b1 = params["conv1_b"].reshape(1, c1).astype(f32)
    sc1 = params["bn1_gamma"] / jnp.sqrt(params["bn1_var"] + eps)
    bn1s = sc1.reshape(1, c1).astype(f32)
    bn1t = (params["bn1_beta"] - params["bn1_mean"] * sc1).reshape(1, c1).astype(f32)

    w2 = params["conv2_w"].transpose(2, 3, 1, 0).reshape(n_tap2, c1, c2).astype(f32)
    b2 = params["conv2_b"].reshape(1, c2).astype(f32)
    sc2 = params["bn2_gamma"] / jnp.sqrt(params["bn2_var"] + eps)
    bn2s = sc2.reshape(1, c2).astype(f32)
    bn2t = (params["bn2_beta"] - params["bn2_mean"] * sc2).reshape(1, c2).astype(f32)

    # fc1 rows permuted to (position, channel, out): torch.flatten order (C,H,W).
    wf1 = params["fc1_w"].reshape(f1_out, c2, pos2).transpose(2, 1, 0).astype(f32)
    bf1 = params["fc1_b"].reshape(1, f1_out).astype(f32)
    wf2 = params["fc2_w"].reshape(1, f1_out).astype(f32)
    bf2 = params["fc2_b"].reshape(1, 1).astype(f32)

    patches = _conv1_patches_conv2_tap_major(x.astype(f32), k1, s1, k2, s2, pos2_pad)

    # ---- batch blocking: grid >= 2 whenever B >= 2 so the "parallel" axis can be
    #      sharded across v7x's two TensorCores (no-op on v5e/v6e, 1 TC) ----
    if samples_per_block is None:
        bb = max(1, min(8, B // 2))
    else:
        bb = max(1, min(int(samples_per_block), B))
    b_pad = _round_up(B, bb)
    if b_pad != B:
        # Padded samples compute finite garbage and are sliced off below; nothing in
        # the kernel reduces across the sample axis, so this is safe.
        patches = jnp.pad(patches, ((0, b_pad - B), (0, 0), (0, 0)))
    grid = (b_pad // bb,)

    kernel = _make_fused_kernel(bb, n_tap2, pos2_pad, pos2)

    operands = (patches, w1, b1, bn1s, bn1t, w2, b2, bn2s, bn2t, wf1, bf1, wf2, bf2)
    flops = 2 * b_pad * (n_rows * feat1 * c1 + n_tap2 * pos2_pad * c1 * c2
                         + pos2 * c2 * f1_out + f1_out)
    bytes_accessed = sum(int(np.prod(a.shape)) * 4 for a in operands) + b_pad * 4
    cost = pl.CostEstimate(flops=flops, transcendentals=0, bytes_accessed=bytes_accessed)

    def _resident(shape):
        zeros = (0,) * len(shape)
        return pl.BlockSpec(shape, lambda i, z=zeros: z)

    out = pl.pallas_call(
        kernel,
        out_shape=jax.ShapeDtypeStruct((b_pad, 1, 1), f32),
        grid=grid,
        in_specs=[
            pl.BlockSpec((bb, n_rows, feat1), lambda i: (i, 0, 0)),  # streamed per step
            _resident(w1.shape), _resident(b1.shape),
            _resident(bn1s.shape), _resident(bn1t.shape),
            _resident(w2.shape), _resident(b2.shape),
            _resident(bn2s.shape), _resident(bn2t.shape),
            _resident(wf1.shape), _resident(bf1.shape),
            _resident(wf2.shape), _resident(bf2.shape),
        ],
        out_specs=pl.BlockSpec((bb, 1, 1), lambda i: (i, 0, 0)),
        compiler_params=pltpu.CompilerParams(
            dimension_semantics=("parallel",),
            vmem_limit_bytes=8 * 1024 * 1024,  # explicit budget; fits every TPU gen
        ),
        cost_estimate=cost,
    )(*operands)

    # Only HBM store of the whole forward is this (B,1) result (negligible bytes).
    return out.reshape(b_pad, 1)[:B]


# ---------------------------------------------------------------------------
# Pure jnp/lax reference (no Pallas), f32, HIGHEST matmul/conv precision
# ---------------------------------------------------------------------------

def sac_value_forward_reference(x, params, conv_strides=(2, 2)):
    s1, s2 = conv_strides
    eps = 1e-5
    dn = ("NCHW", "OIHW", "NCHW")
    prec = lax.Precision.HIGHEST

    def bn(y, g, b, m, v):
        sc = g / jnp.sqrt(v + eps)
        return y * sc.reshape(1, -1, 1, 1) + (b - m * sc).reshape(1, -1, 1, 1)

    y = lax.conv_general_dilated(x, params["conv1_w"], (s1, s1), "VALID",
                                 dimension_numbers=dn, precision=prec)
    y = jnp.maximum(y + params["conv1_b"].reshape(1, -1, 1, 1), 0.0)
    y = bn(y, params["bn1_gamma"], params["bn1_beta"], params["bn1_mean"], params["bn1_var"])

    y = lax.conv_general_dilated(y, params["conv2_w"], (s2, s2), "VALID",
                                 dimension_numbers=dn, precision=prec)
    y = jnp.maximum(y + params["conv2_b"].reshape(1, -1, 1, 1), 0.0)
    y = bn(y, params["bn2_gamma"], params["bn2_beta"], params["bn2_mean"], params["bn2_var"])

    xf = y.reshape(y.shape[0], -1)              # per-sample flatten, (C, H, W) order
    h = jnp.maximum(jnp.dot(xf, params["fc1_w"].T, precision=prec) + params["fc1_b"], 0.0)
    return jnp.dot(h, params["fc2_w"].T, precision=prec) + params["fc2_b"]


# ---------------------------------------------------------------------------
# Test
# ---------------------------------------------------------------------------

if __name__ == "__main__":
    # Config equivalent: conv1=(4,8,3,2), conv2=(8,16,3,2), no 'conv3',
    # fc1=(144,64), fc2=(64,1), env_name != 'CarRacing*', initial_weight_required=True.
    batch, c_in, hw = 2, 4, 16
    c1_out, c2_out = 8, 16
    ksz, stride = 3, 2
    oh1 = (hw - ksz) // stride + 1              # 7
    oh2 = (oh1 - ksz) // stride + 1             # 3
    fc1_in = c2_out * oh2 * oh2                 # 144
    fc1_out, fc2_out = 64, 1

    key = jax.random.PRNGKey(0)
    ks = jax.random.split(key, 20)

    def xavier(k, shape, fan_in, fan_out):
        # torch.nn.init.xavier_uniform_(gain=1); init_weight only touches weights.
        bound = float(np.sqrt(6.0 / (fan_in + fan_out)))
        return jax.random.uniform(k, shape, jnp.float32, -bound, bound)

    params = dict(
        conv1_w=xavier(ks[0], (c1_out, c_in, ksz, ksz), c_in * ksz * ksz, c1_out * ksz * ksz),
        conv1_b=0.05 * jax.random.normal(ks[1], (c1_out,), jnp.float32),
        bn1_gamma=jax.random.uniform(ks[2], (c1_out,), jnp.float32, 0.8, 1.2),
        bn1_beta=0.1 * jax.random.normal(ks[3], (c1_out,), jnp.float32),
        bn1_mean=0.1 * jax.random.normal(ks[4], (c1_out,), jnp.float32),
        bn1_var=jax.random.uniform(ks[5], (c1_out,), jnp.float32, 0.5, 1.5),
        conv2_w=xavier(ks[6], (c2_out, c1_out, ksz, ksz), c1_out * ksz * ksz, c2_out * ksz * ksz),
        conv2_b=0.05 * jax.random.normal(ks[7], (c2_out,), jnp.float32),
        bn2_gamma=jax.random.uniform(ks[8], (c2_out,), jnp.float32, 0.8, 1.2),
        bn2_beta=0.1 * jax.random.normal(ks[9], (c2_out,), jnp.float32),
        bn2_mean=0.1 * jax.random.normal(ks[10], (c2_out,), jnp.float32),
        bn2_var=jax.random.uniform(ks[11], (c2_out,), jnp.float32, 0.5, 1.5),
        fc1_w=xavier(ks[12], (fc1_out, fc1_in), fc1_in, fc1_out),
        fc1_b=0.05 * jax.random.normal(ks[13], (fc1_out,), jnp.float32),
        fc2_w=xavier(ks[14], (fc2_out, fc1_out), fc1_out, fc2_out),
        fc2_b=0.05 * jax.random.normal(ks[15], (fc2_out,), jnp.float32),
    )
    x = jax.random.normal(ks[16], (batch, c_in, hw, hw), jnp.float32)

    fwd = jax.jit(sac_value_forward_pallas)
    out = jax.block_until_ready(fwd(x, params))
    ref = jax.block_until_ready(sac_value_forward_reference(x, params))

    assert out.shape == (batch, fc2_out), out.shape
    # f32 end-to-end in the kernel; tolerance leaves headroom for the MXU's f32 pass
    # decomposition while still catching any layout/index-plumbing bug (those would be
    # O(1) off).
    np.testing.assert_allclose(np.asarray(out), np.asarray(ref), rtol=2e-2, atol=2e-2)

    print("KERNEL_OK")
</pallas_src>

<mosaic_0001>
module attributes {stable_mosaic.version = 11 : i64} {
  func.func @kernel(%arg0: i32, %arg1: memref<1x144x36xf32, #tpu.memory_space<vmem>>, %arg2: memref<36x8xf32, #tpu.memory_space<vmem>>, %arg3: memref<1x8xf32, #tpu.memory_space<vmem>>, %arg4: memref<1x8xf32, #tpu.memory_space<vmem>>, %arg5: memref<1x8xf32, #tpu.memory_space<vmem>>, %arg6: memref<9x8x16xf32, #tpu.memory_space<vmem>>, %arg7: memref<1x16xf32, #tpu.memory_space<vmem>>, %arg8: memref<1x16xf32, #tpu.memory_space<vmem>>, %arg9: memref<1x16xf32, #tpu.memory_space<vmem>>, %arg10: memref<9x16x64xf32, #tpu.memory_space<vmem>>, %arg11: memref<1x64xf32, #tpu.memory_space<vmem>>, %arg12: memref<1x64xf32, #tpu.memory_space<vmem>>, %arg13: memref<1x1xf32, #tpu.memory_space<vmem>>, %arg14: memref<1x1x1xf32, #tpu.memory_space<vmem>>) attributes {dimension_semantics = [#tpu.dimension_semantics<parallel>], iteration_bounds = array<i64: 2>, scalar_prefetch = 0 : i64, scratch_operands = 0 : i64, tpu.core_type = #tpu.core_type<tc>, window_params = [{transform_indices = @transform_0, window_bounds = array<i64: 1, 144, 36>}, {pipeline_mode = #tpu.pipeline_mode<synchronous>, transform_indices = @transform_1, window_bounds = array<i64: 36, 8>}, {pipeline_mode = #tpu.pipeline_mode<synchronous>, transform_indices = @transform_2, window_bounds = array<i64: 1, 8>}, {pipeline_mode = #tpu.pipeline_mode<synchronous>, transform_indices = @transform_3, window_bounds = array<i64: 1, 8>}, {pipeline_mode = #tpu.pipeline_mode<synchronous>, transform_indices = @transform_4, window_bounds = array<i64: 1, 8>}, {pipeline_mode = #tpu.pipeline_mode<synchronous>, transform_indices = @transform_5, window_bounds = array<i64: 9, 8, 16>}, {pipeline_mode = #tpu.pipeline_mode<synchronous>, transform_indices = @transform_6, window_bounds = array<i64: 1, 16>}, {pipeline_mode = #tpu.pipeline_mode<synchronous>, transform_indices = @transform_7, window_bounds = array<i64: 1, 16>}, {pipeline_mode = #tpu.pipeline_mode<synchronous>, transform_indices = @transform_8, window_bounds = array<i64: 1, 16>}, {pipeline_mode = #tpu.pipeline_mode<synchronous>, transform_indices = @transform_9, window_bounds = array<i64: 9, 16, 64>}, {pipeline_mode = #tpu.pipeline_mode<synchronous>, transform_indices = @transform_10, window_bounds = array<i64: 1, 64>}, {pipeline_mode = #tpu.pipeline_mode<synchronous>, transform_indices = @transform_11, window_bounds = array<i64: 1, 64>}, {pipeline_mode = #tpu.pipeline_mode<synchronous>, transform_indices = @transform_12, window_bounds = array<i64: 1, 1>}, {transform_indices = @transform_13, window_bounds = array<i64: 1, 1, 1>}]} {
    %c0 = arith.constant 0 : index
    %c0_0 = arith.constant 0 : index
    %0 = vector.load %arg2[%c0, %c0_0] : memref<36x8xf32, #tpu.memory_space<vmem>>, vector<36x8xf32>
    %c0_1 = arith.constant 0 : index
    %c0_2 = arith.constant 0 : index
    %1 = vector.load %arg3[%c0_1, %c0_2] : memref<1x8xf32, #tpu.memory_space<vmem>>, vector<1x8xf32>
    %c0_3 = arith.constant 0 : index
    %c0_4 = arith.constant 0 : index
    %2 = vector.load %arg4[%c0_3, %c0_4] : memref<1x8xf32, #tpu.memory_space<vmem>>, vector<1x8xf32>
    %c0_5 = arith.constant 0 : index
    %c0_6 = arith.constant 0 : index
    %3 = vector.load %arg5[%c0_5, %c0_6] : memref<1x8xf32, #tpu.memory_space<vmem>>, vector<1x8xf32>
    %c0_7 = arith.constant 0 : index
    %c0_8 = arith.constant 0 : index
    %4 = vector.load %arg7[%c0_7, %c0_8] : memref<1x16xf32, #tpu.memory_space<vmem>>, vector<1x16xf32>
    %c0_9 = arith.constant 0 : index
    %c0_10 = arith.constant 0 : index
    %5 = vector.load %arg8[%c0_9, %c0_10] : memref<1x16xf32, #tpu.memory_space<vmem>>, vector<1x16xf32>
    %c0_11 = arith.constant 0 : index
    %c0_12 = arith.constant 0 : index
    %6 = vector.load %arg9[%c0_11, %c0_12] : memref<1x16xf32, #tpu.memory_space<vmem>>, vector<1x16xf32>
    %c0_13 = arith.constant 0 : index
    %c0_14 = arith.constant 0 : index
    %7 = vector.load %arg11[%c0_13, %c0_14] : memref<1x64xf32, #tpu.memory_space<vmem>>, vector<1x64xf32>
    %c0_15 = arith.constant 0 : index
    %c0_16 = arith.constant 0 : index
    %8 = vector.load %arg12[%c0_15, %c0_16] : memref<1x64xf32, #tpu.memory_space<vmem>>, vector<1x64xf32>
    %c0_17 = arith.constant 0 : index
    %c0_18 = arith.constant 0 : index
    %9 = vector.load %arg13[%c0_17, %c0_18] : memref<1x1xf32, #tpu.memory_space<vmem>>, vector<1x1xf32>
    %c0_19 = arith.constant 0 : index
    %c0_20 = arith.constant 0 : index
    %c0_21 = arith.constant 0 : index
    %10 = vector.load %arg1[%c0_19, %c0_20, %c0_21] : memref<1x144x36xf32, #tpu.memory_space<vmem>>, vector<1x144x36xf32>
    %11 = vector.shape_cast %10 : vector<1x144x36xf32> to vector<144x36xf32>
    %cst = arith.constant dense<0.000000e+00> : vector<144x8xf32>
    %12 = tpu.matmul %11, %0, %cst {dimension_numbers = #tpu.dot_dimension_numbers<[1], [0], [0], [1], [0, 0, 1, 1], [], []>} : vector<144x36xf32>, vector<36x8xf32>, vector<144x8xf32> -> vector<144x8xf32>
    %13 = vector.broadcast %1 : vector<1x8xf32> to vector<144x8xf32>
    %14 = arith.addf %12, %13 : vector<144x8xf32>
    %cst_22 = arith.constant 0.000000e+00 : f32
    %15 = vector.broadcast %cst_22 : f32 to vector<144x8xf32>
    %16 = arith.maximumf %14, %15 : vector<144x8xf32>
    %17 = vector.broadcast %2 : vector<1x8xf32> to vector<144x8xf32>
    %18 = arith.mulf %16, %17 : vector<144x8xf32>
    %19 = vector.broadcast %3 : vector<1x8xf32> to vector<144x8xf32>
    %20 = arith.addf %18, %19 : vector<144x8xf32>
    %21 = vector.extract_strided_slice %20 {offsets = [0, 0], sizes = [16, 8], strides = [1, 1]} : vector<144x8xf32> to vector<16x8xf32>
    %c0_23 = arith.constant 0 : index
    %c0_24 = arith.constant 0 : index
    %c0_25 = arith.constant 0 : index
    %22 = vector.load %arg6[%c0_23, %c0_24, %c0_25] : memref<9x8x16xf32, #tpu.memory_space<vmem>>, vector<1x8x16xf32>
    %23 = vector.shape_cast %22 : vector<1x8x16xf32> to vector<8x16xf32>
    %cst_26 = arith.constant dense<0.000000e+00> : vector<16x16xf32>
    %24 = tpu.matmul %21, %23, %cst_26 {dimension_numbers = #tpu.dot_dimension_numbers<[1], [0], [0], [1], [0, 0, 1, 1], [], []>} : vector<16x8xf32>, vector<8x16xf32>, vector<16x16xf32> -> vector<16x16xf32>
    %25 = vector.extract_strided_slice %20 {offsets = [16, 0], sizes = [16, 8], strides = [1, 1]} : vector<144x8xf32> to vector<16x8xf32>
    %c1 = arith.constant 1 : index
    %c0_27 = arith.constant 0 : index
    %c0_28 = arith.constant 0 : index
    %26 = vector.load %arg6[%c1, %c0_27, %c0_28] : memref<9x8x16xf32, #tpu.memory_space<vmem>>, vector<1x8x16xf32>
    %27 = vector.shape_cast %26 : vector<1x8x16xf32> to vector<8x16xf32>
    %cst_29 = arith.constant dense<0.000000e+00> : vector<16x16xf32>
    %28 = tpu.matmul %25, %27, %cst_29 {dimension_numbers = #tpu.dot_dimension_numbers<[1], [0], [0], [1], [0, 0, 1, 1], [], []>} : vector<16x8xf32>, vector<8x16xf32>, vector<16x16xf32> -> vector<16x16xf32>
    %29 = arith.addf %24, %28 : vector<16x16xf32>
    %30 = vector.extract_strided_slice %20 {offsets = [32, 0], sizes = [16, 8], strides = [1, 1]} : vector<144x8xf32> to vector<16x8xf32>
    %c2 = arith.constant 2 : index
    %c0_30 = arith.constant 0 : index
    %c0_31 = arith.constant 0 : index
    %31 = vector.load %arg6[%c2, %c0_30, %c0_31] : memref<9x8x16xf32, #tpu.memory_space<vmem>>, vector<1x8x16xf32>
    %32 = vector.shape_cast %31 : vector<1x8x16xf32> to vector<8x16xf32>
    %cst_32 = arith.constant dense<0.000000e+00> : vector<16x16xf32>
    %33 = tpu.matmul %30, %32, %cst_32 {dimension_numbers = #tpu.dot_dimension_numbers<[1], [0], [0], [1], [0, 0, 1, 1], [], []>} : vector<16x8xf32>, vector<8x16xf32>, vector<16x16xf32> -> vector<16x16xf32>
    %34 = arith.addf %29, %33 : vector<16x16xf32>
    %35 = vector.extract_strided_slice %20 {offsets = [48, 0], sizes = [16, 8], strides = [1, 1]} : vector<144x8xf32> to vector<16x8xf32>
    %c3 = arith.constant 3 : index
    %c0_33 = arith.constant 0 : index
    %c0_34 = arith.constant 0 : index
    %36 = vector.load %arg6[%c3, %c0_33, %c0_34] : memref<9x8x16xf32, #tpu.memory_space<vmem>>, vector<1x8x16xf32>
    %37 = vector.shape_cast %36 : vector<1x8x16xf32> to vector<8x16xf32>
    %cst_35 = arith.constant dense<0.000000e+00> : vector<16x16xf32>
    %38 = tpu.matmul %35, %37, %cst_35 {dimension_numbers = #tpu.dot_dimension_numbers<[1], [0], [0], [1], [0, 0, 1, 1], [], []>} : vector<16x8xf32>, vector<8x16xf32>, vector<16x16xf32> -> vector<16x16xf32>
    %39 = arith.addf %34, %38 : vector<16x16xf32>
    %40 = vector.extract_strided_slice %20 {offsets = [64, 0], sizes = [16, 8], strides = [1, 1]} : vector<144x8xf32> to vector<16x8xf32>
    %c4 = arith.constant 4 : index
    %c0_36 = arith.constant 0 : index
    %c0_37 = arith.constant 0 : index
    %41 = vector.load %arg6[%c4, %c0_36, %c0_37] : memref<9x8x16xf32, #tpu.memory_space<vmem>>, vector<1x8x16xf32>
    %42 = vector.shape_cast %41 : vector<1x8x16xf32> to vector<8x16xf32>
    %cst_38 = arith.constant dense<0.000000e+00> : vector<16x16xf32>
    %43 = tpu.matmul %40, %42, %cst_38 {dimension_numbers = #tpu.dot_dimension_numbers<[1], [0], [0], [1], [0, 0, 1, 1], [], []>} : vector<16x8xf32>, vector<8x16xf32>, vector<16x16xf32> -> vector<16x16xf32>
    %44 = arith.addf %39, %43 : vector<16x16xf32>
    %45 = vector.extract_strided_slice %20 {offsets = [80, 0], sizes = [16, 8], strides = [1, 1]} : vector<144x8xf32> to vector<16x8xf32>
    %c5 = arith.constant 5 : index
    %c0_39 = arith.constant 0 : index
    %c0_40 = arith.constant 0 : index
    %46 = vector.load %arg6[%c5, %c0_39, %c0_40] : memref<9x8x16xf32, #tpu.memory_space<vmem>>, vector<1x8x16xf32>
    %47 = vector.shape_cast %46 : vector<1x8x16xf32> to vector<8x16xf32>
    %cst_41 = arith.constant dense<0.000000e+00> : vector<16x16xf32>
    %48 = tpu.matmul %45, %47, %cst_41 {dimension_numbers = #tpu.dot_dimension_numbers<[1], [0], [0], [1], [0, 0, 1, 1], [], []>} : vector<16x8xf32>, vector<8x16xf32>, vector<16x16xf32> -> vector<16x16xf32>
    %49 = arith.addf %44, %48 : vector<16x16xf32>
    %50 = vector.extract_strided_slice %20 {offsets = [96, 0], sizes = [16, 8], strides = [1, 1]} : vector<144x8xf32> to vector<16x8xf32>
    %c6 = arith.constant 6 : index
    %c0_42 = arith.constant 0 : index
    %c0_43 = arith.constant 0 : index
    %51 = vector.load %arg6[%c6, %c0_42, %c0_43] : memref<9x8x16xf32, #tpu.memory_space<vmem>>, vector<1x8x16xf32>
    %52 = vector.shape_cast %51 : vector<1x8x16xf32> to vector<8x16xf32>
    %cst_44 = arith.constant dense<0.000000e+00> : vector<16x16xf32>
    %53 = tpu.matmul %50, %52, %cst_44 {dimension_numbers = #tpu.dot_dimension_numbers<[1], [0], [0], [1], [0, 0, 1, 1], [], []>} : vector<16x8xf32>, vector<8x16xf32>, vector<16x16xf32> -> vector<16x16xf32>
    %54 = arith.addf %49, %53 : vector<16x16xf32>
    %55 = vector.extract_strided_slice %20 {offsets = [112, 0], sizes = [16, 8], strides = [1, 1]} : vector<144x8xf32> to vector<16x8xf32>
    %c7 = arith.constant 7 : index
    %c0_45 = arith.constant 0 : index
    %c0_46 = arith.constant 0 : index
    %56 = vector.load %arg6[%c7, %c0_45, %c0_46] : memref<9x8x16xf32, #tpu.memory_space<vmem>>, vector<1x8x16xf32>
    %57 = vector.shape_cast %56 : vector<1x8x16xf32> to vector<8x16xf32>
    %cst_47 = arith.constant dense<0.000000e+00> : vector<16x16xf32>
    %58 = tpu.matmul %55, %57, %cst_47 {dimension_numbers = #tpu.dot_dimension_numbers<[1], [0], [0], [1], [0, 0, 1, 1], [], []>} : vector<16x8xf32>, vector<8x16xf32>, vector<16x16xf32> -> vector<16x16xf32>
    %59 = arith.addf %54, %58 : vector<16x16xf32>
    %60 = vector.extract_strided_slice %20 {offsets = [128, 0], sizes = [16, 8], strides = [1, 1]} : vector<144x8xf32> to vector<16x8xf32>
    %c8 = arith.constant 8 : index
    %c0_48 = arith.constant 0 : index
    %c0_49 = arith.constant 0 : index
    %61 = vector.load %arg6[%c8, %c0_48, %c0_49] : memref<9x8x16xf32, #tpu.memory_space<vmem>>, vector<1x8x16xf32>
    %62 = vector.shape_cast %61 : vector<1x8x16xf32> to vector<8x16xf32>
    %cst_50 = arith.constant dense<0.000000e+00> : vector<16x16xf32>
    %63 = tpu.matmul %60, %62, %cst_50 {dimension_numbers = #tpu.dot_dimension_numbers<[1], [0], [0], [1], [0, 0, 1, 1], [], []>} : vector<16x8xf32>, vector<8x16xf32>, vector<16x16xf32> -> vector<16x16xf32>
    %64 = arith.addf %59, %63 : vector<16x16xf32>
    %65 = vector.broadcast %4 : vector<1x16xf32> to vector<16x16xf32>
    %66 = arith.addf %64, %65 : vector<16x16xf32>
    %cst_51 = arith.constant 0.000000e+00 : f32
    %67 = vector.broadcast %cst_51 : f32 to vector<16x16xf32>
    %68 = arith.maximumf %66, %67 : vector<16x16xf32>
    %69 = vector.broadcast %5 : vector<1x16xf32> to vector<16x16xf32>
    %70 = arith.mulf %68, %69 : vector<16x16xf32>
    %71 = vector.broadcast %6 : vector<1x16xf32> to vector<16x16xf32>
    %72 = arith.addf %70, %71 : vector<16x16xf32>
    %73 = vector.extract_strided_slice %72 {offsets = [0, 0], sizes = [1, 16], strides = [1, 1]} : vector<16x16xf32> to vector<1x16xf32>
    %c0_52 = arith.constant 0 : index
    %c0_53 = arith.constant 0 : index
    %c0_54 = arith.constant 0 : index
    %74 = vector.load %arg10[%c0_52, %c0_53, %c0_54] : memref<9x16x64xf32, #tpu.memory_space<vmem>>, vector<1x16x64xf32>
    %75 = vector.shape_cast %74 : vector<1x16x64xf32> to vector<16x64xf32>
    %cst_55 = arith.constant dense<0.000000e+00> : vector<1x64xf32>
    %76 = tpu.matmul %73, %75, %cst_55 {dimension_numbers = #tpu.dot_dimension_numbers<[1], [0], [0], [1], [0, 0, 1, 1], [], []>} : vector<1x16xf32>, vector<16x64xf32>, vector<1x64xf32> -> vector<1x64xf32>
    %77 = vector.extract_strided_slice %72 {offsets = [1, 0], sizes = [1, 16], strides = [1, 1]} : vector<16x16xf32> to vector<1x16xf32>
    %c1_56 = arith.constant 1 : index
    %c0_57 = arith.constant 0 : index
    %c0_58 = arith.constant 0 : index
    %78 = vector.load %arg10[%c1_56, %c0_57, %c0_58] : memref<9x16x64xf32, #tpu.memory_space<vmem>>, vector<1x16x64xf32>
    %79 = vector.shape_cast %78 : vector<1x16x64xf32> to vector<16x64xf32>
    %cst_59 = arith.constant dense<0.000000e+00> : vector<1x64xf32>
    %80 = tpu.matmul %77, %79, %cst_59 {dimension_numbers = #tpu.dot_dimension_numbers<[1], [0], [0], [1], [0, 0, 1, 1], [], []>} : vector<1x16xf32>, vector<16x64xf32>, vector<1x64xf32> -> vector<1x64xf32>
    %81 = arith.addf %76, %80 : vector<1x64xf32>
    %82 = vector.extract_strided_slice %72 {offsets = [2, 0], sizes = [1, 16], strides = [1, 1]} : vector<16x16xf32> to vector<1x16xf32>
    %c2_60 = arith.constant 2 : index
    %c0_61 = arith.constant 0 : index
    %c0_62 = arith.constant 0 : index
    %83 = vector.load %arg10[%c2_60, %c0_61, %c0_62] : memref<9x16x64xf32, #tpu.memory_space<vmem>>, vector<1x16x64xf32>
    %84 = vector.shape_cast %83 : vector<1x16x64xf32> to vector<16x64xf32>
    %cst_63 = arith.constant dense<0.000000e+00> : vector<1x64xf32>
    %85 = tpu.matmul %82, %84, %cst_63 {dimension_numbers = #tpu.dot_dimension_numbers<[1], [0], [0], [1], [0, 0, 1, 1], [], []>} : vector<1x16xf32>, vector<16x64xf32>, vector<1x64xf32> -> vector<1x64xf32>
    %86 = arith.addf %81, %85 : vector<1x64xf32>
    %87 = vector.extract_strided_slice %72 {offsets = [3, 0], sizes = [1, 16], strides = [1, 1]} : vector<16x16xf32> to vector<1x16xf32>
    %c3_64 = arith.constant 3 : index
    %c0_65 = arith.constant 0 : index
    %c0_66 = arith.constant 0 : index
    %88 = vector.load %arg10[%c3_64, %c0_65, %c0_66] : memref<9x16x64xf32, #tpu.memory_space<vmem>>, vector<1x16x64xf32>
    %89 = vector.shape_cast %88 : vector<1x16x64xf32> to vector<16x64xf32>
    %cst_67 = arith.constant dense<0.000000e+00> : vector<1x64xf32>
    %90 = tpu.matmul %87, %89, %cst_67 {dimension_numbers = #tpu.dot_dimension_numbers<[1], [0], [0], [1], [0, 0, 1, 1], [], []>} : vector<1x16xf32>, vector<16x64xf32>, vector<1x64xf32> -> vector<1x64xf32>
    %91 = arith.addf %86, %90 : vector<1x64xf32>
    %92 = vector.extract_strided_slice %72 {offsets = [4, 0], sizes = [1, 16], strides = [1, 1]} : vector<16x16xf32> to vector<1x16xf32>
    %c4_68 = arith.constant 4 : index
    %c0_69 = arith.constant 0 : index
    %c0_70 = arith.constant 0 : index
    %93 = vector.load %arg10[%c4_68, %c0_69, %c0_70] : memref<9x16x64xf32, #tpu.memory_space<vmem>>, vector<1x16x64xf32>
    %94 = vector.shape_cast %93 : vector<1x16x64xf32> to vector<16x64xf32>
    %cst_71 = arith.constant dense<0.000000e+00> : vector<1x64xf32>
    %95 = tpu.matmul %92, %94, %cst_71 {dimension_numbers = #tpu.dot_dimension_numbers<[1], [0], [0], [1], [0, 0, 1, 1], [], []>} : vector<1x16xf32>, vector<16x64xf32>, vector<1x64xf32> -> vector<1x64xf32>
    %96 = arith.addf %91, %95 : vector<1x64xf32>
    %97 = vector.extract_strided_slice %72 {offsets = [5, 0], sizes = [1, 16], strides = [1, 1]} : vector<16x16xf32> to vector<1x16xf32>
    %c5_72 = arith.constant 5 : index
    %c0_73 = arith.constant 0 : index
    %c0_74 = arith.constant 0 : index
    %98 = vector.load %arg10[%c5_72, %c0_73, %c0_74] : memref<9x16x64xf32, #tpu.memory_space<vmem>>, vector<1x16x64xf32>
    %99 = vector.shape_cast %98 : vector<1x16x64xf32> to vector<16x64xf32>
    %cst_75 = arith.constant dense<0.000000e+00> : vector<1x64xf32>
    %100 = tpu.matmul %97, %99, %cst_75 {dimension_numbers = #tpu.dot_dimension_numbers<[1], [0], [0], [1], [0, 0, 1, 1], [], []>} : vector<1x16xf32>, vector<16x64xf32>, vector<1x64xf32> -> vector<1x64xf32>
    %101 = arith.addf %96, %100 : vector<1x64xf32>
    %102 = vector.extract_strided_slice %72 {offsets = [6, 0], sizes = [1, 16], strides = [1, 1]} : vector<16x16xf32> to vector<1x16xf32>
    %c6_76 = arith.constant 6 : index
    %c0_77 = arith.constant 0 : index
    %c0_78 = arith.constant 0 : index
    %103 = vector.load %arg10[%c6_76, %c0_77, %c0_78] : memref<9x16x64xf32, #tpu.memory_space<vmem>>, vector<1x16x64xf32>
    %104 = vector.shape_cast %103 : vector<1x16x64xf32> to vector<16x64xf32>
    %cst_79 = arith.constant dense<0.000000e+00> : vector<1x64xf32>
    %105 = tpu.matmul %102, %104, %cst_79 {dimension_numbers = #tpu.dot_dimension_numbers<[1], [0], [0], [1], [0, 0, 1, 1], [], []>} : vector<1x16xf32>, vector<16x64xf32>, vector<1x64xf32> -> vector<1x64xf32>
    %106 = arith.addf %101, %105 : vector<1x64xf32>
    %107 = vector.extract_strided_slice %72 {offsets = [7, 0], sizes = [1, 16], strides = [1, 1]} : vector<16x16xf32> to vector<1x16xf32>
    %c7_80 = arith.constant 7 : index
    %c0_81 = arith.constant 0 : index
    %c0_82 = arith.constant 0 : index
    %108 = vector.load %arg10[%c7_80, %c0_81, %c0_82] : memref<9x16x64xf32, #tpu.memory_space<vmem>>, vector<1x16x64xf32>
    %109 = vector.shape_cast %108 : vector<1x16x64xf32> to vector<16x64xf32>
    %cst_83 = arith.constant dense<0.000000e+00> : vector<1x64xf32>
    %110 = tpu.matmul %107, %109, %cst_83 {dimension_numbers = #tpu.dot_dimension_numbers<[1], [0], [0], [1], [0, 0, 1, 1], [], []>} : vector<1x16xf32>, vector<16x64xf32>, vector<1x64xf32> -> vector<1x64xf32>
    %111 = arith.addf %106, %110 : vector<1x64xf32>
    %112 = vector.extract_strided_slice %72 {offsets = [8, 0], sizes = [1, 16], strides = [1, 1]} : vector<16x16xf32> to vector<1x16xf32>
    %c8_84 = arith.constant 8 : index
    %c0_85 = arith.constant 0 : index
    %c0_86 = arith.constant 0 : index
    %113 = vector.load %arg10[%c8_84, %c0_85, %c0_86] : memref<9x16x64xf32, #tpu.memory_space<vmem>>, vector<1x16x64xf32>
    %114 = vector.shape_cast %113 : vector<1x16x64xf32> to vector<16x64xf32>
    %cst_87 = arith.constant dense<0.000000e+00> : vector<1x64xf32>
    %115 = tpu.matmul %112, %114, %cst_87 {dimension_numbers = #tpu.dot_dimension_numbers<[1], [0], [0], [1], [0, 0, 1, 1], [], []>} : vector<1x16xf32>, vector<16x64xf32>, vector<1x64xf32> -> vector<1x64xf32>
    %116 = arith.addf %111, %115 : vector<1x64xf32>
    %117 = arith.addf %116, %7 : vector<1x64xf32>
    %cst_88 = arith.constant 0.000000e+00 : f32
    %118 = vector.broadcast %cst_88 : f32 to vector<1x64xf32>
    %119 = arith.maximumf %117, %118 : vector<1x64xf32>
    %120 = arith.mulf %119, %8 : vector<1x64xf32>
    %cst_89 = arith.constant dense<0.000000e+00> : vector<1xf32>
    %121 = vector.multi_reduction <add>, %120, %cst_89 [1] : vector<1x64xf32> to vector<1xf32>
    %122 = vector.shape_cast %121 : vector<1xf32> to vector<1x1xf32>
    %123 = arith.addf %122, %9 : vector<1x1xf32>
    %c0_90 = arith.constant 0 : index
    %c0_91 = arith.constant 0 : index
    %c0_92 = arith.constant 0 : index
    %124 = vector.load %arg14[%c0_90, %c0_91, %c0_92] : memref<1x1x1xf32, #tpu.memory_space<vmem>>, vector<1x1x1xf32>
    %125 = vector.shape_cast %124 : vector<1x1x1xf32> to vector<1x1xf32>
    %126 = vector.shape_cast %123 : vector<1x1xf32> to vector<1x1x1xf32>
    tpu.vector_store %arg14[%c0_90, %c0_91, %c0_92], %126 {strides = array<i32>} : memref<1x1x1xf32, #tpu.memory_space<vmem>>, vector<1x1x1xf32>,
    return
  }
  func.func @transform_0(%arg0: i32) -> (i32, i32, i32) {
    %c0_i32 = arith.constant 0 : i32
    %c0_i32_0 = arith.constant 0 : i32
    %c0_i32_1 = arith.constant 0 : i32
    return %arg0, %c0_i32, %c0_i32_0 : i32, i32, i32
  }
  func.func @transform_1(%arg0: i32) -> (i32, i32) {
    %c0_i32 = arith.constant 0 : i32
    %c0_i32_0 = arith.constant 0 : i32
    %c0_i32_1 = arith.constant 0 : i32
    return %c0_i32, %c0_i32_0 : i32, i32
  }
  func.func @transform_2(%arg0: i32) -> (i32, i32) {
    %c0_i32 = arith.constant 0 : i32
    %c0_i32_0 = arith.constant 0 : i32
    %c0_i32_1 = arith.constant 0 : i32
    return %c0_i32, %c0_i32_0 : i32, i32
  }
  func.func @transform_3(%arg0: i32) -> (i32, i32) {
    %c0_i32 = arith.constant 0 : i32
    %c0_i32_0 = arith.constant 0 : i32
    %c0_i32_1 = arith.constant 0 : i32
    return %c0_i32, %c0_i32_0 : i32, i32
  }
  func.func @transform_4(%arg0: i32) -> (i32, i32) {
    %c0_i32 = arith.constant 0 : i32
    %c0_i32_0 = arith.constant 0 : i32
    %c0_i32_1 = arith.constant 0 : i32
    return %c0_i32, %c0_i32_0 : i32, i32
  }
  func.func @transform_5(%arg0: i32) -> (i32, i32, i32) {
    %c0_i32 = arith.constant 0 : i32
    %c0_i32_0 = arith.constant 0 : i32
    %c0_i32_1 = arith.constant 0 : i32
    %c0_i32_2 = arith.constant 0 : i32
    return %c0_i32, %c0_i32_0, %c0_i32_1 : i32, i32, i32
  }
  func.func @transform_6(%arg0: i32) -> (i32, i32) {
    %c0_i32 = arith.constant 0 : i32
    %c0_i32_0 = arith.constant 0 : i32
    %c0_i32_1 = arith.constant 0 : i32
    return %c0_i32, %c0_i32_0 : i32, i32
  }
  func.func @transform_7(%arg0: i32) -> (i32, i32) {
    %c0_i32 = arith.constant 0 : i32
    %c0_i32_0 = arith.constant 0 : i32
    %c0_i32_1 = arith.constant 0 : i32
    return %c0_i32, %c0_i32_0 : i32, i32
  }
  func.func @transform_8(%arg0: i32) -> (i32, i32) {
    %c0_i32 = arith.constant 0 : i32
    %c0_i32_0 = arith.constant 0 : i32
    %c0_i32_1 = arith.constant 0 : i32
    return %c0_i32, %c0_i32_0 : i32, i32
  }
  func.func @transform_9(%arg0: i32) -> (i32, i32, i32) {
    %c0_i32 = arith.constant 0 : i32
    %c0_i32_0 = arith.constant 0 : i32
    %c0_i32_1 = arith.constant 0 : i32
    %c0_i32_2 = arith.constant 0 : i32
    return %c0_i32, %c0_i32_0, %c0_i32_1 : i32, i32, i32
  }
  func.func @transform_10(%arg0: i32) -> (i32, i32) {
    %c0_i32 = arith.constant 0 : i32
    %c0_i32_0 = arith.constant 0 : i32
    %c0_i32_1 = arith.constant 0 : i32
    return %c0_i32, %c0_i32_0 : i32, i32
  }
  func.func @transform_11(%arg0: i32) -> (i32, i32) {
    %c0_i32 = arith.constant 0 : i32
    %c0_i32_0 = arith.constant 0 : i32
    %c0_i32_1 = arith.constant 0 : i32
    return %c0_i32, %c0_i32_0 : i32, i32
  }
  func.func @transform_12(%arg0: i32) -> (i32, i32) {
    %c0_i32 = arith.constant 0 : i32
    %c0_i32_0 = arith.constant 0 : i32
    %c0_i32_1 = arith.constant 0 : i32
    return %c0_i32, %c0_i32_0 : i32, i32
  }
  func.func @transform_13(%arg0: i32) -> (i32, i32, i32) {
    %c0_i32 = arith.constant 0 : i32
    %c0_i32_0 = arith.constant 0 : i32
    %c0_i32_1 = arith.constant 0 : i32
    return %arg0, %c0_i32, %c0_i32_0 : i32, i32, i32
  }
}

</mosaic_0001>

<llo_original>
// kernel: sac_value_forward_pallas.1
$region0: #{sac_value_forward_pallas.1}
  #allocation0 [shape = 'u32[]', space=smem, size = 0x4, offset = 0x4, fixed_abs, tag = 'smem constant byte address 0x4 - core index']
  #allocation1 [shape = 'u32[144,128]{1,0:T(1,128)}', space=vmem, size = 0x12000, scoped, tag = 'internal scratch']
  #allocation2 [shape = 'f32[1,1]{1,0:T(1,128)S(1)}', space=vmem, size = 0x200, scoped, tag = 'scoped memory for sac_value_forward_pallas.1']
  %s0 = inlined_call_operand.vmem [shape: f32[2,144,36], index: 0, kind: input, shape index: {}]
  %s1 = inlined_call_operand.vmem [shape: f32[36,8], index: 1, kind: input, shape index: {}]
  %s2 = inlined_call_operand.vmem [shape: f32[1,8], index: 2, kind: input, shape index: {}]
  %s3 = inlined_call_operand.vmem [shape: f32[1,8], index: 3, kind: input, shape index: {}]
  %s4 = inlined_call_operand.vmem [shape: f32[1,8], index: 4, kind: input, shape index: {}]
  %s5 = inlined_call_operand.vmem [shape: f32[9,8,16], index: 5, kind: input, shape index: {}]
  %s6 = inlined_call_operand.vmem [shape: f32[1,16], index: 6, kind: input, shape index: {}]
  %s7 = inlined_call_operand.vmem [shape: f32[1,16], index: 7, kind: input, shape index: {}]
  %s8 = inlined_call_operand.vmem [shape: f32[1,16], index: 8, kind: input, shape index: {}]
  %s9 = inlined_call_operand.vmem [shape: f32[9,16,64], index: 9, kind: input, shape index: {}]
  %s10 = inlined_call_operand.vmem [shape: f32[1,64], index: 10, kind: input, shape index: {}]
  %s11 = inlined_call_operand.vmem [shape: f32[1,64], index: 11, kind: input, shape index: {}]
  %s12 = inlined_call_operand.<no memory space> [shape: f32[1,1], index: 12, kind: input, shape index: {}]
  %s13 = inlined_call_operand.vmem [shape: f32[2,1,1], index: 13, kind: output, shape index: {}]
  %s14 = sld [smem:[#allocation0]]
  $region85: #{sac_value_forward_pallas.1} parent=0
    _
  %s16 = ssub.s32 1, %s14
  %s17 = scalar_select 0, %s16, %s14
  %v18 = vstv %s12
  %19 = vst [vmem:[#allocation2] sm:$0x1] %v18
  loop: start=0, step=1, limit=4
  $region2: #{sac_value_forward_pallas.1} parent=0 // loop_pre_header
    _
  $region3: #{sac_value_forward_pallas.1} parent=0 // loop_header
    %s21 = sphi 0, %s25
    %p22 = scmp.ge.s32.totalorder %s21, 4
    %s31 = sphi 0, %s33
    %s34 = sphi 0, %s31
    %s35 = sphi 0, %s34
    %s51 = sphi 0, %s35
    %s55 = sphi 0, %s55
    %s57 = sphi 0, %s55
    %s58 = sphi 0, %s57
    %s72 = sphi 0, %s58
    %s76 = sphi 0, %s76
    %s78 = sphi 0, %s76
    %s79 = sphi 0, %s78
    %s93 = sphi 0, %s79
    %s97 = sphi 0, %s97
    %s99 = sphi 0, %s97
    %s100 = sphi 0, %s99
    %s114 = sphi 0, %s100
    %s118 = sphi 0, %s118
    %s120 = sphi 0, %s118
    %s121 = sphi 0, %s120
    %s135 = sphi 0, %s121
    %s139 = sphi 0, %s139
    %s141 = sphi 0, %s139
    %s142 = sphi 0, %s141
    %s156 = sphi 0, %s142
    %s160 = sphi 0, %s160
    %s162 = sphi 0, %s160
    %s163 = sphi 0, %s162
    %s177 = sphi 0, %s163
    %s181 = sphi 0, %s181
    %s183 = sphi 0, %s181
    %s184 = sphi 0, %s183
    %s198 = sphi 0, %s184
    %s202 = sphi 0, %s202
    %s204 = sphi 0, %s202
    %s205 = sphi 0, %s204
    %s219 = sphi 0, %s205
    %s223 = sphi 0, %s223
    %s225 = sphi 0, %s223
    %s226 = sphi 0, %s225
    %s240 = sphi 0, %s226
    %s244 = sphi 0, %s244
    %s246 = sphi 0, %s244
    %s247 = sphi 0, %s246
    %s261 = sphi 0, %s247
    %s265 = sphi 0, %s265
    %s267 = sphi 0, %s265
    %s268 = sphi 0, %s267
    %s282 = sphi 0, %s268
    %s286 = sphi 0, %s286
    %s288 = sphi 0, %s286
    %s289 = sphi 0, %s288
    %s303 = sphi 0, %s289
    %s309 = sphi 0, %s311
    %s312 = sphi 0, %s309
    %s313 = sphi 0, %s312
    %s329 = sphi 0, %s313
  $region4: #{sac_value_forward_pallas.1} parent=0 // loop_header_branch
    %24 = sbr.rel (%p22) target = $region8
  $region5: #{sac_value_forward_pallas.1} parent=0 // loop_body
    %s26 = ssub.s32 %s21, 1
    %s27 = ssub.s32 %s21, 2
    %s28 = sadd.s32 %s21, 1
    %s29 = ssub.s32 %s21, %s28
    %p30 = scmp.eq.s32.totalorder %s29, 0
    %s32 = sadd.s32 %s31, 1
    %s33 = scalar_select %p30, %s31, %s32
    %p36 = pneg %p30
    %p37 = scmp.eq.s32.totalorder %s21, 1
    %p38 = por %p36, %p37
    %p39 = scmp.ne.s32.totalorder %s31, %s34
    %p40 = scmp.eq.s32.totalorder %s21, 0
    %p41 = por %p39, %p40
    %p42 = scmp.ne.s32.totalorder %s31, %s34
    %p43 = scmp.eq.s32.totalorder %s26, 1
    %p44 = por %p42, %p43
    %p45 = scmp.ne.s32.totalorder %s34, %s35
    %p46 = scmp.eq.s32.totalorder %s26, 0
    %p47 = por %p45, %p46
    %p48 = scmp.ne.s32.totalorder %s34, %s35
    %p49 = scmp.eq.s32.totalorder %s27, 1
    %p50 = por %p48, %p49
    %p52 = scmp.ne.s32.totalorder %s35, %s51
    %p53 = scmp.eq.s32.totalorder %s27, 0
    %p54 = por %p52, %p53
    %s56 = sadd.s32 %s55, 1
    %p59 = scmp.eq.s32.totalorder %s21, 1
    %p60 = scmp.ne.s32.totalorder %s55, %s57
    %p61 = scmp.eq.s32.totalorder %s21, 0
    %p62 = por %p60, %p61
    %p63 = scmp.ne.s32.totalorder %s55, %s57
    %p64 = scmp.eq.s32.totalorder %s26, 1
    %p65 = por %p63, %p64
    %p66 = scmp.ne.s32.totalorder %s57, %s58
    %p67 = scmp.eq.s32.totalorder %s26, 0
    %p68 = por %p66, %p67
    %p69 = scmp.ne.s32.totalorder %s57, %s58
    %p70 = scmp.eq.s32.totalorder %s27, 1
    %p71 = por %p69, %p70
    %p73 = scmp.ne.s32.totalorder %s58, %s72
    %p74 = scmp.eq.s32.totalorder %s27, 0
    %p75 = por %p73, %p74
    %s77 = sadd.s32 %s76, 1
    %p80 = scmp.eq.s32.totalorder %s21, 1
    %p81 = scmp.ne.s32.totalorder %s76, %s78
    %p82 = scmp.eq.s32.totalorder %s21, 0
    %p83 = por %p81, %p82
    %p84 = scmp.ne.s32.totalorder %s76, %s78
    %p85 = scmp.eq.s32.totalorder %s26, 1
    %p86 = por %p84, %p85
    %p87 = scmp.ne.s32.totalorder %s78, %s79
    %p88 = scmp.eq.s32.totalorder %s26, 0
    %p89 = por %p87, %p88
    %p90 = scmp.ne.s32.totalorder %s78, %s79
    %p91 = scmp.eq.s32.totalorder %s27, 1
    %p92 = por %p90, %p91
    %p94 = scmp.ne.s32.totalorder %s79, %s93
    %p95 = scmp.eq.s32.totalorder %s27, 0
    %p96 = por %p94, %p95
    %s98 = sadd.s32 %s97, 1
    %p101 = scmp.eq.s32.totalorder %s21, 1
    %p102 = scmp.ne.s32.totalorder %s97, %s99
    %p103 = scmp.eq.s32.totalorder %s21, 0
    %p104 = por %p102, %p103
    %p105 = scmp.ne.s32.totalorder %s97, %s99
    %p106 = scmp.eq.s32.totalorder %s26, 1
    %p107 = por %p105, %p106
    %p108 = scmp.ne.s32.totalorder %s99, %s100
    %p109 = scmp.eq.s32.totalorder %s26, 0
    %p110 = por %p108, %p109
    %p111 = scmp.ne.s32.totalorder %s99, %s100
    %p112 = scmp.eq.s32.totalorder %s27, 1
    %p113 = por %p111, %p112
    %p115 = scmp.ne.s32.totalorder %s100, %s114
    %p116 = scmp.eq.s32.totalorder %s27, 0
    %p117 = por %p115, %p116
    %s119 = sadd.s32 %s118, 1
    %p122 = scmp.eq.s32.totalorder %s21, 1
    %p123 = scmp.ne.s32.totalorder %s118, %s120
    %p124 = scmp.eq.s32.totalorder %s21, 0
    %p125 = por %p123, %p124
    %p126 = scmp.ne.s32.totalorder %s118, %s120
    %p127 = scmp.eq.s32.totalorder %s26, 1
    %p128 = por %p126, %p127
    %p129 = scmp.ne.s32.totalorder %s120, %s121
    %p130 = scmp.eq.s32.totalorder %s26, 0
    %p131 = por %p129, %p130
    %p132 = scmp.ne.s32.totalorder %s120, %s121
    %p133 = scmp.eq.s32.totalorder %s27, 1
    %p134 = por %p132, %p133
    %p136 = scmp.ne.s32.totalorder %s121, %s135
    %p137 = scmp.eq.s32.totalorder %s27, 0
    %p138 = por %p136, %p137
    %s140 = sadd.s32 %s139, 1
    %p143 = scmp.eq.s32.totalorder %s21, 1
    %p144 = scmp.ne.s32.totalorder %s139, %s141
    %p145 = scmp.eq.s32.totalorder %s21, 0
    %p146 = por %p144, %p145
    %p147 = scmp.ne.s32.totalorder %s139, %s141
    %p148 = scmp.eq.s32.totalorder %s26, 1
    %p149 = por %p147, %p148
    %p150 = scmp.ne.s32.totalorder %s141, %s142
    %p151 = scmp.eq.s32.totalorder %s26, 0
    %p152 = por %p150, %p151
    %p153 = scmp.ne.s32.totalorder %s141, %s142
    %p154 = scmp.eq.s32.totalorder %s27, 1
    %p155 = por %p153, %p154
    %p157 = scmp.ne.s32.totalorder %s142, %s156
    %p158 = scmp.eq.s32.totalorder %s27, 0
    %p159 = por %p157, %p158
    %s161 = sadd.s32 %s160, 1
    %p164 = scmp.eq.s32.totalorder %s21, 1
    %p165 = scmp.ne.s32.totalorder %s160, %s162
    %p166 = scmp.eq.s32.totalorder %s21, 0
    %p167 = por %p165, %p166
    %p168 = scmp.ne.s32.totalorder %s160, %s162
    %p169 = scmp.eq.s32.totalorder %s26, 1
    %p170 = por %p168, %p169
    %p171 = scmp.ne.s32.totalorder %s162, %s163
    %p172 = scmp.eq.s32.totalorder %s26, 0
    %p173 = por %p171, %p172
    %p174 = scmp.ne.s32.totalorder %s162, %s163
    %p175 = scmp.eq.s32.totalorder %s27, 1
    %p176 = por %p174, %p175
    %p178 = scmp.ne.s32.totalorder %s163, %s177
    %p179 = scmp.eq.s32.totalorder %s27, 0
    %p180 = por %p178, %p179
    %s182 = sadd.s32 %s181, 1
    %p185 = scmp.eq.s32.totalorder %s21, 1
    %p186 = scmp.ne.s32.totalorder %s181, %s183
    %p187 = scmp.eq.s32.totalorder %s21, 0
    %p188 = por %p186, %p187
    %p189 = scmp.ne.s32.totalorder %s181, %s183
    %p190 = scmp.eq.s32.totalorder %s26, 1
    %p191 = por %p189, %p190
    %p192 = scmp.ne.s32.totalorder %s183, %s184
    %p193 = scmp.eq.s32.totalorder %s26, 0
    %p194 = por %p192, %p193
    %p195 = scmp.ne.s32.totalorder %s183, %s184
    %p196 = scmp.eq.s32.totalorder %s27, 1
    %p197 = por %p195, %p196
    %p199 = scmp.ne.s32.totalorder %s184, %s198
    %p200 = scmp.eq.s32.totalorder %s27, 0
    %p201 = por %p199, %p200
    %s203 = sadd.s32 %s202, 1
    %p206 = scmp.eq.s32.totalorder %s21, 1
    %p207 = scmp.ne.s32.totalorder %s202, %s204
    %p208 = scmp.eq.s32.totalorder %s21, 0
    %p209 = por %p207, %p208
    %p210 = scmp.ne.s32.totalorder %s202, %s204
    %p211 = scmp.eq.s32.totalorder %s26, 1
    %p212 = por %p210, %p211
    %p213 = scmp.ne.s32.totalorder %s204, %s205
    %p214 = scmp.eq.s32.totalorder %s26, 0
    %p215 = por %p213, %p214
    %p216 = scmp.ne.s32.totalorder %s204, %s205
    %p217 = scmp.eq.s32.totalorder %s27, 1
    %p218 = por %p216, %p217
    %p220 = scmp.ne.s32.totalorder %s205, %s219
    %p221 = scmp.eq.s32.totalorder %s27, 0
    %p222 = por %p220, %p221
    %s224 = sadd.s32 %s223, 1
    %p227 = scmp.eq.s32.totalorder %s21, 1
    %p228 = scmp.ne.s32.totalorder %s223, %s225
    %p229 = scmp.eq.s32.totalorder %s21, 0
    %p230 = por %p228, %p229
    %p231 = scmp.ne.s32.totalorder %s223, %s225
    %p232 = scmp.eq.s32.totalorder %s26, 1
    %p233 = por %p231, %p232
    %p234 = scmp.ne.s32.totalorder %s225, %s226
    %p235 = scmp.eq.s32.totalorder %s26, 0
    %p236 = por %p234, %p235
    %p237 = scmp.ne.s32.totalorder %s225, %s226
    %p238 = scmp.eq.s32.totalorder %s27, 1
    %p239 = por %p237, %p238
    %p241 = scmp.ne.s32.totalorder %s226, %s240
    %p242 = scmp.eq.s32.totalorder %s27, 0
    %p243 = por %p241, %p242
    %s245 = sadd.s32 %s244, 1
    %p248 = scmp.eq.s32.totalorder %s21, 1
    %p249 = scmp.ne.s32.totalorder %s244, %s246
    %p250 = scmp.eq.s32.totalorder %s21, 0
    %p251 = por %p249, %p250
    %p252 = scmp.ne.s32.totalorder %s244, %s246
    %p253 = scmp.eq.s32.totalorder %s26, 1
    %p254 = por %p252, %p253
    %p255 = scmp.ne.s32.totalorder %s246, %s247
    %p256 = scmp.eq.s32.totalorder %s26, 0
    %p257 = por %p255, %p256
    %p258 = scmp.ne.s32.totalorder %s246, %s247
    %p259 = scmp.eq.s32.totalorder %s27, 1
    %p260 = por %p258, %p259
    %p262 = scmp.ne.s32.totalorder %s247, %s261
    %p263 = scmp.eq.s32.totalorder %s27, 0
    %p264 = por %p262, %p263
    %s266 = sadd.s32 %s265, 1
    %p269 = scmp.eq.s32.totalorder %s21, 1
    %p270 = scmp.ne.s32.totalorder %s265, %s267
    %p271 = scmp.eq.s32.totalorder %s21, 0
    %p272 = por %p270, %p271
    %p273 = scmp.ne.s32.totalorder %s265, %s267
    %p274 = scmp.eq.s32.totalorder %s26, 1
    %p275 = por %p273, %p274
    %p276 = scmp.ne.s32.totalorder %s267, %s268
    %p277 = scmp.eq.s32.totalorder %s26, 0
    %p278 = por %p276, %p277
    %p279 = scmp.ne.s32.totalorder %s267, %s268
    %p280 = scmp.eq.s32.totalorder %s27, 1
    %p281 = por %p279, %p280
    %p283 = scmp.ne.s32.totalorder %s268, %s282
    %p284 = scmp.eq.s32.totalorder %s27, 0
    %p285 = por %p283, %p284
    %s287 = sadd.s32 %s286, 1
    %p290 = scmp.eq.s32.totalorder %s21, 1
    %p291 = scmp.ne.s32.totalorder %s286, %s288
    %p292 = scmp.eq.s32.totalorder %s21, 0
    %p293 = por %p291, %p292
    %p294 = scmp.ne.s32.totalorder %s286, %s288
    %p295 = scmp.eq.s32.totalorder %s26, 1
    %p296 = por %p294, %p295
    %p297 = scmp.ne.s32.totalorder %s288, %s289
    %p298 = scmp.eq.s32.totalorder %s26, 0
    %p299 = por %p297, %p298
    %p300 = scmp.ne.s32.totalorder %s288, %s289
    %p301 = scmp.eq.s32.totalorder %s27, 1
    %p302 = por %p300, %p301
    %p304 = scmp.ne.s32.totalorder %s289, %s303
    %p305 = scmp.eq.s32.totalorder %s27, 0
    %p306 = por %p304, %p305
    %s307 = ssub.s32 %s21, %s28
    %p308 = scmp.eq.s32.totalorder %s307, 0
    %s310 = sadd.s32 %s309, 1
    %s311 = scalar_select %p308, %s309, %s310
    %p314 = pneg %p308
    %p315 = scmp.eq.s32.totalorder %s21, 1
    %p316 = por %p314, %p315
    %p317 = scmp.ne.s32.totalorder %s309, %s312
    %p318 = scmp.eq.s32.totalorder %s21, 0
    %p319 = por %p317, %p318
    %p320 = scmp.ne.s32.totalorder %s309, %s312
    %p321 = scmp.eq.s32.totalorder %s26, 1
    %p322 = por %p320, %p321
    %p323 = scmp.ne.s32.totalorder %s312, %s313
    %p324 = scmp.eq.s32.totalorder %s26, 0
    %p325 = por %p323, %p324
    %p326 = scmp.ne.s32.totalorder %s312, %s313
    %p327 = scmp.eq.s32.totalorder %s27, 1
    %p328 = por %p326, %p327
    %p330 = scmp.ne.s32.totalorder %s313, %s329
    %p331 = scmp.eq.s32.totalorder %s27, 0
    %p332 = por %p330, %p331
    %p333 = scmp.le.s32.totalorder 1, %s21
    %p334 = scmp.lt.s32.totalorder %s21, 3
    %p335 = pnand %p333, %p334
    %p336 = pneg %p335
    // Predicated region
    $region9: #{sac_value_forward_pallas.1} parent=5 // pred_check
      _
    $region10: #{sac_value_forward_pallas.1} parent=5 // pred_check_branch
      %338 = sbr.rel (%p335) target = $region12
    $region11: #{sac_value_forward_pallas.1} parent=5 // pred_region
      %s339 = ssub.s32 %s21, 1
      // Predicated region
      $region13: #{sac_value_forward_pallas.1} parent=11 // pred_check
        %p340 = pneg %p68
      $region14: #{sac_value_forward_pallas.1} parent=11 // pred_check_branch
        %342 = sbr.rel (%p340) target = $region16
      $region15: #{sac_value_forward_pallas.1} parent=11 // pred_region
        _
      $region16: #{sac_value_forward_pallas.1} parent=11 // pred_fallthru
        _
      // Predicated region
      $region17: #{sac_value_forward_pallas.1} parent=11 // pred_check
        %p343 = pneg %p89
      $region18: #{sac_value_forward_pallas.1} parent=11 // pred_check_branch
        %345 = sbr.rel (%p343) target = $region20
      $region19: #{sac_value_forward_pallas.1} parent=11 // pred_region
        _
      $region20: #{sac_value_forward_pallas.1} parent=11 // pred_fallthru
        _
      // Predicated region
      $region21: #{sac_value_forward_pallas.1} parent=11 // pred_check
        %p346 = pneg %p110
      $region22: #{sac_value_forward_pallas.1} parent=11 // pred_check_branch
        %348 = sbr.rel (%p346) target = $region24
      $region23: #{sac_value_forward_pallas.1} parent=11 // pred_region
        _
      $region24: #{sac_value_forward_pallas.1} parent=11 // pred_fallthru
        _
      // Predicated region
      $region25: #{sac_value_forward_pallas.1} parent=11 // pred_check
        %p349 = pneg %p131
      $region26: #{sac_value_forward_pallas.1} parent=11 // pred_check_branch
        %351 = sbr.rel (%p349) target = $region28
      $region27: #{sac_value_forward_pallas.1} parent=11 // pred_region
        _
      $region28: #{sac_value_forward_pallas.1} parent=11 // pred_fallthru
        _
      // Predicated region
      $region29: #{sac_value_forward_pallas.1} parent=11 // pred_check
        %p352 = pneg %p152
      $region30: #{sac_value_forward_pallas.1} parent=11 // pred_check_branch
        %354 = sbr.rel (%p352) target = $region32
      $region31: #{sac_value_forward_pallas.1} parent=11 // pred_region
        _
      $region32: #{sac_value_forward_pallas.1} parent=11 // pred_fallthru
        _
      // Predicated region
      $region33: #{sac_value_forward_pallas.1} parent=11 // pred_check
        %p355 = pneg %p173
      $region34: #{sac_value_forward_pallas.1} parent=11 // pred_check_branch
        %357 = sbr.rel (%p355) target = $region36
      $region35: #{sac_value_forward_pallas.1} parent=11 // pred_region
        _
      $region36: #{sac_value_forward_pallas.1} parent=11 // pred_fallthru
        _
      // Predicated region
      $region37: #{sac_value_forward_pallas.1} parent=11 // pred_check
        %p358 = pneg %p194
      $region38: #{sac_value_forward_pallas.1} parent=11 // pred_check_branch
        %360 = sbr.rel (%p358) target = $region40
      $region39: #{sac_value_forward_pallas.1} parent=11 // pred_region
        _
      $region40: #{sac_value_forward_pallas.1} parent=11 // pred_fallthru
        _
      // Predicated region
      $region41: #{sac_value_forward_pallas.1} parent=11 // pred_check
        %p361 = pneg %p215
      $region42: #{sac_value_forward_pallas.1} parent=11 // pred_check_branch
        %363 = sbr.rel (%p361) target = $region44
      $region43: #{sac_value_forward_pallas.1} parent=11 // pred_region
        _
      $region44: #{sac_value_forward_pallas.1} parent=11 // pred_fallthru
        _
      // Predicated region
      $region45: #{sac_value_forward_pallas.1} parent=11 // pred_check
        %p364 = pneg %p236
      $region46: #{sac_value_forward_pallas.1} parent=11 // pred_check_branch
        %366 = sbr.rel (%p364) target = $region48
      $region47: #{sac_value_forward_pallas.1} parent=11 // pred_region
        _
      $region48: #{sac_value_forward_pallas.1} parent=11 // pred_fallthru
        _
      // Predicated region
      $region49: #{sac_value_forward_pallas.1} parent=11 // pred_check
        %p367 = pneg %p257
      $region50: #{sac_value_forward_pallas.1} parent=11 // pred_check_branch
        %369 = sbr.rel (%p367) target = $region52
      $region51: #{sac_value_forward_pallas.1} parent=11 // pred_region
        _
      $region52: #{sac_value_forward_pallas.1} parent=11 // pred_fallthru
        _
      // Predicated region
      $region53: #{sac_value_forward_pallas.1} parent=11 // pred_check
        %p370 = pneg %p278
      $region54: #{sac_value_forward_pallas.1} parent=11 // pred_check_branch
        %372 = sbr.rel (%p370) target = $region56
      $region55: #{sac_value_forward_pallas.1} parent=11 // pred_region
        _
      $region56: #{sac_value_forward_pallas.1} parent=11 // pred_fallthru
        _
      // Predicated region
      $region57: #{sac_value_forward_pallas.1} parent=11 // pred_check
        %p373 = pneg %p299
      $region58: #{sac_value_forward_pallas.1} parent=11 // pred_check_branch
        %375 = sbr.rel (%p373) target = $region60
      $region59: #{sac_value_forward_pallas.1} parent=11 // pred_region
        _
      $region60: #{sac_value_forward_pallas.1} parent=11 // pred_fallthru
        _
    $region12: #{sac_value_forward_pallas.1} parent=5 // pred_fallthru
      _
    %p376 = scmp.lt.s32.totalorder %s21, 2
    // Predicated region
    $region61: #{sac_value_forward_pallas.1} parent=5 // pred_check
      %p377 = pneg %p376
    $region62: #{sac_value_forward_pallas.1} parent=5 // pred_check_branch
      %379 = sbr.rel (%p377) target = $region64
    $region63: #{sac_value_forward_pallas.1} parent=5 // pred_region
      // Predicated region
      $region65: #{sac_value_forward_pallas.1} parent=63 // pred_check
        %p380 = pneg %p41
      $region66: #{sac_value_forward_pallas.1} parent=63 // pred_check_branch
        %382 = sbr.rel (%p380) target = $region68
      $region67: #{sac_value_forward_pallas.1} parent=63 // pred_region
        %p383 = scmp.lt.s32.totalorder %s21, 1
        %s384 = scalar_select %p383, %s21, 1
        %s385 = smul.addr %s384, 18
        %s386 = smul.addr %s385, 8
        %s387 = scalar_lea.vmem %s0, %s386
      $region68: #{sac_value_forward_pallas.1} parent=63 // pred_fallthru
        _
    $region64: #{sac_value_forward_pallas.1} parent=5 // pred_fallthru
      _
    %p388 = scmp.le.s32.totalorder 1, %s21
    %p389 = scmp.lt.s32.totalorder %s21, 3
    %p390 = pnand %p388, %p389
    %p391 = pneg %p390
    // Predicated region
    $region69: #{sac_value_forward_pallas.1} parent=5 // pred_check
      _
    $region70: #{sac_value_forward_pallas.1} parent=5 // pred_check_branch
      %393 = sbr.rel (%p390) target = $region72
    $region71: #{sac_value_forward_pallas.1} parent=5 // pred_region
      %s394 = ssub.s32 %s21, 1
      %p395 = scmp.lt.s32.totalorder %s26, 1
      %s396 = scalar_select %p395, %s26, 1
      %s397 = smul.addr %s396, 18
      %s398 = smul.addr %s397, 8
      %s399 = scalar_lea.vmem %s0, %s398
      %p400 = pneg %p47
      %p401 = pneg %p44
      %p402 = pneg %p68
      %p403 = pneg %p65
      %p404 = pneg %p89
      %p405 = pneg %p86
      %p406 = pneg %p110
      %p407 = pneg %p107
      %p408 = pneg %p131
      %p409 = pneg %p128
      %p410 = pneg %p152
      %p411 = pneg %p149
      %p412 = pneg %p173
      %p413 = pneg %p170
      %p414 = pneg %p194
      %p415 = pneg %p191
      %p416 = pneg %p215
      %p417 = pneg %p212
      %p418 = pneg %p236
      %p419 = pneg %p233
      %p420 = pneg %p257
      %p421 = pneg %p254
      %p422 = pneg %p278
      %p423 = pneg %p275
      %p424 = pneg %p299
      %p425 = pneg %p296
      %p426 = pneg %p325
      %p427 = pneg %p322
      %p428 = scmp.lt.s32.totalorder %s26, 1
      %s429 = scalar_select %p428, %s26, 1
      %s430 = scalar_lea.vmem %s13, %s429
      %p431 = scmp.lt.s32.totalorder %s26, 1
      %s432 = scalar_select %p431, %s26, 1
      %s433 = smul.addr %s432, 18
      %s434 = smul.addr %s433, 8
      %s435 = scalar_lea.vmem %s0, %s434
      %p436 = scmp.lt.s32.totalorder %s26, 1
      %s437 = scalar_select %p436, %s26, 1
      %s438 = scalar_lea.vmem %s13, %s437
      %v439 = vld [vmem:[%s1] sm:$0xff]
      %v440 = vld [vmem:[%s1 + $0x8] sm:$0xff]
      %v441 = vld [vmem:[%s1 + $0x10] sm:$0xff]
      %v442 = vld [vmem:[%s1 + $0x18] sm:$0xff]
      %v443 = vld [vmem:[%s1 + $0x20] sm:$0xf]
      %v444 = vld [vmem:[%s2] sm:$0x1]
      %v445 = vld [vmem:[%s3] sm:$0x1]
      %v446 = vld [vmem:[%s4] sm:$0x1]
      %v447 = vld [vmem:[%s6] sm:$0x1]
      %v448 = vld [vmem:[%s7] sm:$0x1]
      %v449 = vld [vmem:[%s8] sm:$0x1]
      %v450 = vld [vmem:[%s10] sm:$0x1]
      %v451 = vld [vmem:[%s11] sm:$0x1]
      %v452 = vld [vmem:[#allocation2] sm:$0x1]
      %v453 = vld [vmem:[%s435] sm:$0xff]
      %v454 = vld [vmem:[%s435 + $0x8] sm:$0xff]
      %v455 = vld [vmem:[%s435 + $0x10] sm:$0xff]
      %v456 = vld [vmem:[%s435 + $0x18] sm:$0xff]
      %v457 = vld [vmem:[%s435 + $0x20] sm:$0xff]
      %v458 = vld [vmem:[%s435 + $0x28] sm:$0xff]
      %v459 = vld [vmem:[%s435 + $0x30] sm:$0xff]
      %v460 = vld [vmem:[%s435 + $0x38] sm:$0xff]
      %v461 = vld [vmem:[%s435 + $0x40] sm:$0xff]
      %v462 = vld [vmem:[%s435 + $0x48] sm:$0xff]
      %v463 = vld [vmem:[%s435 + $0x50] sm:$0xff]
      %v464 = vld [vmem:[%s435 + $0x58] sm:$0xff]
      %v465 = vld [vmem:[%s435 + $0x60] sm:$0xff]
      %v466 = vld [vmem:[%s435 + $0x68] sm:$0xff]
      %v467 = vld [vmem:[%s435 + $0x70] sm:$0xff]
      %v468 = vld [vmem:[%s435 + $0x78] sm:$0xff]
      %v469 = vld [vmem:[%s435 + $0x80] sm:$0xff]
      %v470 = vld [vmem:[%s435 + $0x88] sm:$0xff]
      %v472 = vlaneseq
      %v473 = vshrl.u32 %v472, 7
      %v474 = vsub.s32 0, %v473
      %v475 = vrot.slane %v444, %v474
      %vm477 = vcmask 293888
      %v479 = vsel %vm477, %v453, 0
      %v482 = vsel %vm477, %v454, 0
      %v485 = vsel %vm477, %v455, 0
      %v488 = vsel %vm477, %v456, 0
      %v491 = vsel %vm477, %v457, 0
      %v494 = vsel %vm477, %v458, 0
      %v497 = vsel %vm477, %v459, 0
      %v500 = vsel %vm477, %v460, 0
      %v503 = vsel %vm477, %v461, 0
      %v506 = vsel %vm477, %v462, 0
      %v509 = vsel %vm477, %v463, 0
      %v512 = vsel %vm477, %v464, 0
      %v515 = vsel %vm477, %v465, 0
      %v518 = vsel %vm477, %v466, 0
      %v521 = vsel %vm477, %v467, 0
      %v524 = vsel %vm477, %v468, 0
      %v527 = vsel %vm477, %v469, 0
      %v530 = vsel %vm477, %v470, 0
      %vm532 = vcmask 1043456
      %v534 = vsel %vm532, %v443, 0
      %536 = vmatprep.subr.mxu0 0.0
      %537 = vmatpush1.msra.mxu0 %v439
      %538 = vmatprep.subr.mxu0 0.0
      %539 = vmatpush1.msra.mxu0 %v440
      %540 = vmatprep.subr.mxu0 0.0
      %541 = vmatpush1.msra.mxu0 %v441
      %542 = vmatprep.subr.mxu0 0.0
      %543 = vmatpush1.msra.mxu0 %v442
      %544 = vmatprep.subr.mxu0 0.0
      %545 = vmatpush1.msra.mxu0 %v534
      %546 = vmatprep.subr.mxu0 0.0
      %547 = vmatpush1.msra.mxu0 0.0
      %548 = vmatprep.subr.mxu0 0.0
      %549 = vmatpush1.msra.mxu0 0.0
      %550 = vmatprep.subr.mxu0 0.0
      %551 = vmatpush1.msra.mxu0 0.0
      %552 = vmatprep.subr.mxu0 0.0
      %553 = vmatpush1.msra.mxu0 0.0
      %554 = vmatprep.subr.mxu0 0.0
      %555 = vmatpush1.msra.mxu0 0.0
      %556 = vmatprep.subr.mxu0 0.0
      %557 = vmatpush1.msra.mxu0 0.0
      %558 = vmatprep.subr.mxu0 0.0
      %559 = vmatpush1.msra.mxu0 0.0
      %560 = vmatprep.subr.mxu0 0.0
      %561 = vmatpush1.msra.mxu0 0.0
      %562 = vmatprep.subr.mxu0 0.0
      %563 = vmatpush1.msra.mxu0 0.0
      %564 = vmatprep.subr.mxu0 0.0
      %565 = vmatpush1.msra.mxu0 0.0
      %566 = vmatprep.subr.mxu0 0.0
      %567 = vmatpush1.msra.mxu0 0.0
      %568 = vmatprep.subr.mxu0 0.0
      %569 = vmatpush1.msra.mxu0 0.0
      %570 = vmatprep.subr.mxu0 0.0
      %571 = vmatpush1.msra.mxu0 0.0
      %572 = vmatprep.subr.mxu0 0.0
      %573 = vmatpush1.msra.mxu0 0.0
      %574 = vmatprep.subr.mxu0 0.0
      %575 = vmatpush1.msra.mxu0 0.0
      %576 = vmatprep.subr.mxu0 0.0
      %577 = vmatpush1.msra.mxu0 0.0
      %578 = vmatprep.subr.mxu0 0.0
      %579 = vmatpush1.msra.mxu0 0.0
      %580 = vmatprep.subr.mxu0 0.0
      %581 = vmatpush1.msra.mxu0 0.0
      %582 = vmatprep.subr.mxu0 0.0
      %583 = vmatpush1.msra.mxu0 0.0
      %584 = vmatprep.subr.mxu0 0.0
      %585 = vmatpush1.msra.mxu0 0.0
      %586 = vmatprep.subr.mxu0 0.0
      %587 = vmatpush1.msra.mxu0 0.0
      %588 = vmatprep.subr.mxu0 0.0
      %589 = vmatpush1.msra.mxu0 0.0
      %590 = vmatprep.subr.mxu0 0.0
      %591 = vmatpush1.msra.mxu0 0.0
      %592 = vmatprep.subr.mxu0 0.0
      %593 = vmatpush1.msra.mxu0 0.0
      %594 = vmatprep.subr.mxu0 0.0
      %595 = vmatpush1.msra.mxu0 0.0
      %596 = vmatprep.subr.mxu0 0.0
      %597 = vmatpush1.msra.mxu0 0.0
      %598 = vmatprep.subr.mxu0 0.0
      %599 = vmatpush1.msra.mxu0 0.0
      %600 = vmatprep.mubr.f32.mxu0 0.0
      %601 = vmatmul.mubr.f32.gmra.mrb[0].mxu0 %v479
      %v602 = vpop.f32.mrb[0].mxu0
      %v603 = vadd.f32 %v475, %v602
      %v604 = vpop.f32.mrb[0].mxu0
      %605 = vmatprep.mubr.f32.mxu0 0.0
      %606 = vmatmul.mubr.f32.gmra.mrb[0].mxu0 %v482
      %v607 = vpop.f32.mrb[0].mxu0
      %v608 = vadd.f32 %v475, %v607
      %v609 = vpop.f32.mrb[0].mxu0
      %610 = vmatprep.mubr.f32.mxu0 0.0
      %611 = vmatmul.mubr.f32.gmra.mrb[0].mxu0 %v485
      %v612 = vpop.f32.mrb[0].mxu0
      %v613 = vadd.f32 %v475, %v612
      %v614 = vpop.f32.mrb[0].mxu0
      %615 = vmatprep.mubr.f32.mxu0 0.0
      %616 = vmatmul.mubr.f32.gmra.mrb[0].mxu0 %v488
      %v617 = vpop.f32.mrb[0].mxu0
      %v618 = vadd.f32 %v475, %v617
      %v619 = vpop.f32.mrb[0].mxu0
      %620 = vmatprep.mubr.f32.mxu0 0.0
      %621 = vmatmul.mubr.f32.gmra.mrb[0].mxu0 %v491
      %v622 = vpop.f32.mrb[0].mxu0
      %v623 = vadd.f32 %v475, %v622
      %v624 = vpop.f32.mrb[0].mxu0
      %625 = vmatprep.mubr.f32.mxu0 0.0
      %626 = vmatmul.mubr.f32.gmra.mrb[0].mxu0 %v494
      %v627 = vpop.f32.mrb[0].mxu0
      %v628 = vadd.f32 %v475, %v627
      %v629 = vpop.f32.mrb[0].mxu0
      %630 = vmatprep.mubr.f32.mxu0 0.0
      %631 = vmatmul.mubr.f32.gmra.mrb[0].mxu0 %v497
      %v632 = vpop.f32.mrb[0].mxu0
      %v633 = vadd.f32 %v475, %v632
      %v634 = vpop.f32.mrb[0].mxu0
      %635 = vmatprep.mubr.f32.mxu0 0.0
      %636 = vmatmul.mubr.f32.gmra.mrb[0].mxu0 %v500
      %v637 = vpop.f32.mrb[0].mxu0
      %v638 = vadd.f32 %v475, %v637
      %v639 = vpop.f32.mrb[0].mxu0
      %640 = vmatprep.mubr.f32.mxu0 0.0
      %641 = vmatmul.mubr.f32.gmra.mrb[0].mxu0 %v503
      %v642 = vpop.f32.mrb[0].mxu0
      %v643 = vadd.f32 %v475, %v642
      %v644 = vpop.f32.mrb[0].mxu0
      %645 = vmatprep.mubr.f32.mxu0 0.0
      %646 = vmatmul.mubr.f32.gmra.mrb[0].mxu0 %v506
      %v647 = vpop.f32.mrb[0].mxu0
      %v648 = vadd.f32 %v475, %v647
      %v649 = vpop.f32.mrb[0].mxu0
      %650 = vmatprep.mubr.f32.mxu0 0.0
      %651 = vmatmul.mubr.f32.gmra.mrb[0].mxu0 %v509
      %v652 = vpop.f32.mrb[0].mxu0
      %v653 = vadd.f32 %v475, %v652
      %v654 = vpop.f32.mrb[0].mxu0
      %655 = vmatprep.mubr.f32.mxu0 0.0
      %656 = vmatmul.mubr.f32.gmra.mrb[0].mxu0 %v512
      %v657 = vpop.f32.mrb[0].mxu0
      %v658 = vadd.f32 %v475, %v657
      %v659 = vpop.f32.mrb[0].mxu0
      %660 = vmatprep.mubr.f32.mxu0 0.0
      %661 = vmatmul.mubr.f32.gmra.mrb[0].mxu0 %v515
      %v662 = vpop.f32.mrb[0].mxu0
      %v663 = vadd.f32 %v475, %v662
      %v664 = vpop.f32.mrb[0].mxu0
      %665 = vmatprep.mubr.f32.mxu0 0.0
      %666 = vmatmul.mubr.f32.gmra.mrb[0].mxu0 %v518
      %v667 = vpop.f32.mrb[0].mxu0
      %v668 = vadd.f32 %v475, %v667
      %v669 = vpop.f32.mrb[0].mxu0
      %670 = vmatprep.mubr.f32.mxu0 0.0
      %671 = vmatmul.mubr.f32.gmra.mrb[0].mxu0 %v521
      %v672 = vpop.f32.mrb[0].mxu0
      %v673 = vadd.f32 %v475, %v672
      %v674 = vpop.f32.mrb[0].mxu0
      %675 = vmatprep.mubr.f32.mxu0 0.0
      %676 = vmatmul.mubr.f32.gmra.mrb[0].mxu0 %v524
      %v677 = vpop.f32.mrb[0].mxu0
      %v678 = vadd.f32 %v475, %v677
      %v679 = vpop.f32.mrb[0].mxu0
      %680 = vmatprep.mubr.f32.mxu0 0.0
      %681 = vmatmul.mubr.f32.gmra.mrb[0].mxu0 %v527
      %v682 = vpop.f32.mrb[0].mxu0
      %v683 = vadd.f32 %v475, %v682
      %v684 = vpop.f32.mrb[0].mxu0
      %685 = vmatprep.mubr.f32.mxu0 0.0
      %686 = vmatmul.mubr.f32.gmra.mrb[0].mxu0 %v530
      %v687 = vpop.f32.mrb[0].mxu0
      %v688 = vadd.f32 %v475, %v687
      %v689 = vpop.f32.mrb[0].mxu0
      %690 = vdwg.mxu0
      %v691 = vmax.f32 %v603, 0.0
      %v692 = vmax.f32 %v608, 0.0
      %v693 = vmax.f32 %v613, 0.0
      %v694 = vmax.f32 %v618, 0.0
      %v695 = vmax.f32 %v623, 0.0
      %v696 = vmax.f32 %v628, 0.0
      %v697 = vmax.f32 %v633, 0.0
      %v698 = vmax.f32 %v638, 0.0
      %v699 = vmax.f32 %v643, 0.0
      %v700 = vmax.f32 %v648, 0.0
      %v701 = vmax.f32 %v653, 0.0
      %v702 = vmax.f32 %v658, 0.0
      %v703 = vmax.f32 %v663, 0.0
      %v704 = vmax.f32 %v668, 0.0
      %v705 = vmax.f32 %v673, 0.0
      %v706 = vmax.f32 %v678, 0.0
      %v707 = vmax.f32 %v683, 0.0
      %v708 = vmax.f32 %v688, 0.0
      %v710 = vlaneseq
      %v711 = vshrl.u32 %v710, 7
      %v712 = vsub.s32 0, %v711
      %v713 = vrot.slane %v445, %v712
      %v715 = vmul.f32 %v691, %v713
      %v716 = vmul.f32 %v692, %v713
      %v717 = vmul.f32 %v693, %v713
      %v718 = vmul.f32 %v694, %v713
      %v719 = vmul.f32 %v695, %v713
      %v720 = vmul.f32 %v696, %v713
      %v721 = vmul.f32 %v697, %v713
      %v722 = vmul.f32 %v698, %v713
      %v723 = vmul.f32 %v699, %v713
      %v724 = vmul.f32 %v700, %v713
      %v725 = vmul.f32 %v701, %v713
      %v726 = vmul.f32 %v702, %v713
      %v727 = vmul.f32 %v703, %v713
      %v728 = vmul.f32 %v704, %v713
      %v729 = vmul.f32 %v705, %v713
      %v730 = vmul.f32 %v706, %v713
      %v731 = vmul.f32 %v707, %v713
      %v732 = vmul.f32 %v708, %v713
      %v734 = vlaneseq
      %v735 = vshrl.u32 %v734, 7
      %v736 = vsub.s32 0, %v735
      %v737 = vrot.slane %v446, %v736
      %v739 = vadd.f32 %v715, %v737
      %v740 = vadd.f32 %v716, %v737
      %v741 = vadd.f32 %v717, %v737
      %v742 = vadd.f32 %v718, %v737
      %v743 = vadd.f32 %v719, %v737
      %v744 = vadd.f32 %v720, %v737
      %v745 = vadd.f32 %v721, %v737
      %v746 = vadd.f32 %v722, %v737
      %v747 = vadd.f32 %v723, %v737
      %v748 = vadd.f32 %v724, %v737
      %v749 = vadd.f32 %v725, %v737
      %v750 = vadd.f32 %v726, %v737
      %v751 = vadd.f32 %v727, %v737
      %v752 = vadd.f32 %v728, %v737
      %v753 = vadd.f32 %v729, %v737
      %v754 = vadd.f32 %v730, %v737
      %v755 = vadd.f32 %v731, %v737
      %v756 = vadd.f32 %v732, %v737
      %v757 = vld [vmem:[%s5] sm:$0xff]
      %s758 = scalar_lea.vmem %s5, 8
      %v759 = vld [vmem:[%s758] sm:$0xff]
      %vm760 = vcmask 64512
      %v762 = vsel %vm760, %v741, 0
      %v765 = vsel %vm760, %v742, 0
      %767 = vmatprep.subr.mxu0 0.0
      %768 = vmatpush1.msra.mxu0 %v759
      %769 = vmatprep.subr.mxu0 0.0
      %770 = vmatpush1.msra.mxu0 0.0
      %771 = vmatprep.subr.mxu0 0.0
      %772 = vmatpush1.msra.mxu0 0.0
      %773 = vmatprep.subr.mxu0 0.0
      %774 = vmatpush1.msra.mxu0 0.0
      %775 = vmatprep.subr.mxu0 0.0
      %776 = vmatpush1.msra.mxu0 0.0
      %777 = vmatprep.subr.mxu0 0.0
      %778 = vmatpush1.msra.mxu0 0.0
      %779 = vmatprep.subr.mxu0 0.0
      %780 = vmatpush1.msra.mxu0 0.0
      %781 = vmatprep.subr.mxu0 0.0
      %782 = vmatpush1.msra.mxu0 0.0
      %783 = vmatprep.subr.mxu0 0.0
      %784 = vmatpush1.msra.mxu0 0.0
      %785 = vmatprep.subr.mxu0 0.0
      %786 = vmatpush1.msra.mxu0 0.0
      %787 = vmatprep.subr.mxu0 0.0
      %788 = vmatpush1.msra.mxu0 0.0
      %789 = vmatprep.subr.mxu0 0.0
      %790 = vmatpush1.msra.mxu0 0.0
      %791 = vmatprep.subr.mxu0 0.0
      %792 = vmatpush1.msra.mxu0 0.0
      %793 = vmatprep.subr.mxu0 0.0
      %794 = vmatpush1.msra.mxu0 0.0
      %795 = vmatprep.subr.mxu0 0.0
      %796 = vmatpush1.msra.mxu0 0.0
      %797 = vmatprep.subr.mxu0 0.0
      %798 = vmatpush1.msra.mxu0 0.0
      %799 = vmatprep.subr.mxu0 0.0
      %800 = vmatpush1.msra.mxu0 0.0
      %801 = vmatprep.subr.mxu0 0.0
      %802 = vmatpush1.msra.mxu0 0.0
      %803 = vmatprep.subr.mxu0 0.0
      %804 = vmatpush1.msra.mxu0 0.0
      %805 = vmatprep.subr.mxu0 0.0
      %806 = vmatpush1.msra.mxu0 0.0
      %807 = vmatprep.subr.mxu0 0.0
      %808 = vmatpush1.msra.mxu0 0.0
      %809 = vmatprep.subr.mxu0 0.0
      %810 = vmatpush1.msra.mxu0 0.0
      %811 = vmatprep.subr.mxu0 0.0
      %812 = vmatpush1.msra.mxu0 0.0
      %813 = vmatprep.subr.mxu0 0.0
      %814 = vmatpush1.msra.mxu0 0.0
      %815 = vmatprep.subr.mxu0 0.0
      %816 = vmatpush1.msra.mxu0 0.0
      %817 = vmatprep.subr.mxu0 0.0
      %818 = vmatpush1.msra.mxu0 0.0
      %819 = vmatprep.subr.mxu0 0.0
      %820 = vmatpush1.msra.mxu0 0.0
      %821 = vmatprep.subr.mxu0 0.0
      %822 = vmatpush1.msra.mxu0 0.0
      %823 = vmatprep.subr.mxu0 0.0
      %824 = vmatpush1.msra.mxu0 0.0
      %825 = vmatprep.subr.mxu0 0.0
      %826 = vmatpush1.msra.mxu0 0.0
      %827 = vmatprep.subr.mxu0 0.0
      %828 = vmatpush1.msra.mxu0 0.0
      %829 = vmatprep.subr.mxu0 0.0
      %830 = vmatpush1.msra.mxu0 0.0
      %831 = vmatprep.mubr.f32.mxu0 0.0
      %832 = vmatmul.mubr.f32.gmra.mrb[0].mxu0 %v762
      %v833 = vpop.f32.mrb[0].mxu0
      %v834 = vadd.f32 0.0, %v833
      %v835 = vpop.f32.mrb[0].mxu0
      %836 = vmatprep.mubr.f32.mxu0 0.0
      %837 = vmatmul.mubr.f32.gmra.mrb[0].mxu0 %v765
      %v838 = vpop.f32.mrb[0].mxu0
      %v839 = vadd.f32 0.0, %v838
      %v840 = vpop.f32.mrb[0].mxu0
      %841 = vdwg.mxu0
      %v843 = vsel %vm760, %v739, 0
      %v846 = vsel %vm760, %v740, 0
      %848 = vmatprep.subr.mxu0 0.0
      %849 = vmatpush1.msra.mxu0 %v757
      %850 = vmatprep.subr.mxu0 0.0
      %851 = vmatpush1.msra.mxu0 0.0
      %852 = vmatprep.subr.mxu0 0.0
      %853 = vmatpush1.msra.mxu0 0.0
      %854 = vmatprep.subr.mxu0 0.0
      %855 = vmatpush1.msra.mxu0 0.0
      %856 = vmatprep.subr.mxu0 0.0
      %857 = vmatpush1.msra.mxu0 0.0
      %858 = vmatprep.subr.mxu0 0.0
      %859 = vmatpush1.msra.mxu0 0.0
      %860 = vmatprep.subr.mxu0 0.0
      %861 = vmatpush1.msra.mxu0 0.0
      %862 = vmatprep.subr.mxu0 0.0
      %863 = vmatpush1.msra.mxu0 0.0
      %864 = vmatprep.subr.mxu0 0.0
      %865 = vmatpush1.msra.mxu0 0.0
      %866 = vmatprep.subr.mxu0 0.0
      %867 = vmatpush1.msra.mxu0 0.0
      %868 = vmatprep.subr.mxu0 0.0
      %869 = vmatpush1.msra.mxu0 0.0
      %870 = vmatprep.subr.mxu0 0.0
      %871 = vmatpush1.msra.mxu0 0.0
      %872 = vmatprep.subr.mxu0 0.0
      %873 = vmatpush1.msra.mxu0 0.0
      %874 = vmatprep.subr.mxu0 0.0
      %875 = vmatpush1.msra.mxu0 0.0
      %876 = vmatprep.subr.mxu0 0.0
      %877 = vmatpush1.msra.mxu0 0.0
      %878 = vmatprep.subr.mxu0 0.0
      %879 = vmatpush1.msra.mxu0 0.0
      %880 = vmatprep.subr.mxu0 0.0
      %881 = vmatpush1.msra.mxu0 0.0
      %882 = vmatprep.subr.mxu0 0.0
      %883 = vmatpush1.msra.mxu0 0.0
      %884 = vmatprep.subr.mxu0 0.0
      %885 = vmatpush1.msra.mxu0 0.0
      %886 = vmatprep.subr.mxu0 0.0
      %887 = vmatpush1.msra.mxu0 0.0
      %888 = vmatprep.subr.mxu0 0.0
      %889 = vmatpush1.msra.mxu0 0.0
      %890 = vmatprep.subr.mxu0 0.0
      %891 = vmatpush1.msra.mxu0 0.0
      %892 = vmatprep.subr.mxu0 0.0
      %893 = vmatpush1.msra.mxu0 0.0
      %894 = vmatprep.subr.mxu0 0.0
      %895 = vmatpush1.msra.mxu0 0.0
      %896 = vmatprep.subr.mxu0 0.0
      %897 = vmatpush1.msra.mxu0 0.0
      %898 = vmatprep.subr.mxu0 0.0
      %899 = vmatpush1.msra.mxu0 0.0
      %900 = vmatprep.subr.mxu0 0.0
      %901 = vmatpush1.msra.mxu0 0.0
      %902 = vmatprep.subr.mxu0 0.0
      %903 = vmatpush1.msra.mxu0 0.0
      %904 = vmatprep.subr.mxu0 0.0
      %905 = vmatpush1.msra.mxu0 0.0
      %906 = vmatprep.subr.mxu0 0.0
      %907 = vmatpush1.msra.mxu0 0.0
      %908 = vmatprep.subr.mxu0 0.0
      %909 = vmatpush1.msra.mxu0 0.0
      %910 = vmatprep.subr.mxu0 0.0
      %911 = vmatpush1.msra.mxu0 0.0
      %912 = vmatprep.mubr.f32.mxu0 0.0
      %913 = vmatmul.mubr.f32.gmra.mrb[0].mxu0 %v843
      %v914 = vpop.f32.mrb[0].mxu0
      %v915 = vadd.f32 %v834, %v914
      %v916 = vpop.f32.mrb[0].mxu0
      %917 = vmatprep.mubr.f32.mxu0 0.0
      %918 = vmatmul.mubr.f32.gmra.mrb[0].mxu0 %v846
      %v919 = vpop.f32.mrb[0].mxu0
      %v920 = vadd.f32 %v839, %v919
      %v921 = vpop.f32.mrb[0].mxu0
      %922 = vdwg.mxu0
      %s923 = scalar_lea.vmem %s5, 16
      %v924 = vld [vmem:[%s923] sm:$0xff]
      %v926 = vsel %vm760, %v743, 0
      %v929 = vsel %vm760, %v744, 0
      %931 = vmatprep.subr.mxu0 0.0
      %932 = vmatpush1.msra.mxu0 %v924
      %933 = vmatprep.subr.mxu0 0.0
      %934 = vmatpush1.msra.mxu0 0.0
      %935 = vmatprep.subr.mxu0 0.0
      %936 = vmatpush1.msra.mxu0 0.0
      %937 = vmatprep.subr.mxu0 0.0
      %938 = vmatpush1.msra.mxu0 0.0
      %939 = vmatprep.subr.mxu0 0.0
      %940 = vmatpush1.msra.mxu0 0.0
      %941 = vmatprep.subr.mxu0 0.0
      %942 = vmatpush1.msra.mxu0 0.0
      %943 = vmatprep.subr.mxu0 0.0
      %944 = vmatpush1.msra.mxu0 0.0
      %945 = vmatprep.subr.mxu0 0.0
      %946 = vmatpush1.msra.mxu0 0.0
      %947 = vmatprep.subr.mxu0 0.0
      %948 = vmatpush1.msra.mxu0 0.0
      %949 = vmatprep.subr.mxu0 0.0
      %950 = vmatpush1.msra.mxu0 0.0
      %951 = vmatprep.subr.mxu0 0.0
      %952 = vmatpush1.msra.mxu0 0.0
      %953 = vmatprep.subr.mxu0 0.0
      %954 = vmatpush1.msra.mxu0 0.0
      %955 = vmatprep.subr.mxu0 0.0
      %956 = vmatpush1.msra.mxu0 0.0
      %957 = vmatprep.subr.mxu0 0.0
      %958 = vmatpush1.msra.mxu0 0.0
      %959 = vmatprep.subr.mxu0 0.0
      %960 = vmatpush1.msra.mxu0 0.0
      %961 = vmatprep.subr.mxu0 0.0
      %962 = vmatpush1.msra.mxu0 0.0
      %963 = vmatprep.subr.mxu0 0.0
      %964 = vmatpush1.msra.mxu0 0.0
      %965 = vmatprep.subr.mxu0 0.0
      %966 = vmatpush1.msra.mxu0 0.0
      %967 = vmatprep.subr.mxu0 0.0
      %968 = vmatpush1.msra.mxu0 0.0
      %969 = vmatprep.subr.mxu0 0.0
      %970 = vmatpush1.msra.mxu0 0.0
      %971 = vmatprep.subr.mxu0 0.0
      %972 = vmatpush1.msra.mxu0 0.0
      %973 = vmatprep.subr.mxu0 0.0
      %974 = vmatpush1.msra.mxu0 0.0
      %975 = vmatprep.subr.mxu0 0.0
      %976 = vmatpush1.msra.mxu0 0.0
      %977 = vmatprep.subr.mxu0 0.0
      %978 = vmatpush1.msra.mxu0 0.0
      %979 = vmatprep.subr.mxu0 0.0
      %980 = vmatpush1.msra.mxu0 0.0
      %981 = vmatprep.subr.mxu0 0.0
      %982 = vmatpush1.msra.mxu0 0.0
      %983 = vmatprep.subr.mxu0 0.0
      %984 = vmatpush1.msra.mxu0 0.0
      %985 = vmatprep.subr.mxu0 0.0
      %986 = vmatpush1.msra.mxu0 0.0
      %987 = vmatprep.subr.mxu0 0.0
      %988 = vmatpush1.msra.mxu0 0.0
      %989 = vmatprep.subr.mxu0 0.0
      %990 = vmatpush1.msra.mxu0 0.0
      %991 = vmatprep.subr.mxu0 0.0
      %992 = vmatpush1.msra.mxu0 0.0
      %993 = vmatprep.subr.mxu0 0.0
      %994 = vmatpush1.msra.mxu0 0.0
      %995 = vmatprep.mubr.f32.mxu0 0.0
      %996 = vmatmul.mubr.f32.gmra.mrb[0].mxu0 %v926
      %v997 = vpop.f32.mrb[0].mxu0
      %v998 = vadd.f32 0.0, %v997
      %v999 = vpop.f32.mrb[0].mxu0
      %1000 = vmatprep.mubr.f32.mxu0 0.0
      %1001 = vmatmul.mubr.f32.gmra.mrb[0].mxu0 %v929
      %v1002 = vpop.f32.mrb[0].mxu0
      %v1003 = vadd.f32 0.0, %v1002
      %v1004 = vpop.f32.mrb[0].mxu0
      %1005 = vdwg.mxu0
      %v1006 = vadd.f32 %v915, %v998
      %v1007 = vadd.f32 %v920, %v1003
      %s1008 = scalar_lea.vmem %s5, 24
      %v1009 = vld [vmem:[%s1008] sm:$0xff]
      %v1011 = vsel %vm760, %v745, 0
      %v1014 = vsel %vm760, %v746, 0
      %1016 = vmatprep.subr.mxu0 0.0
      %1017 = vmatpush1.msra.mxu0 %v1009
      %1018 = vmatprep.subr.mxu0 0.0
      %1019 = vmatpush1.msra.mxu0 0.0
      %1020 = vmatprep.subr.mxu0 0.0
      %1021 = vmatpush1.msra.mxu0 0.0
      %1022 = vmatprep.subr.mxu0 0.0
      %1023 = vmatpush1.msra.mxu0 0.0
      %1024 = vmatprep.subr.mxu0 0.0
      %1025 = vmatpush1.msra.mxu0 0.0
      %1026 = vmatprep.subr.mxu0 0.0
      %1027 = vmatpush1.msra.mxu0 0.0
      %1028 = vmatprep.subr.mxu0 0.0
      %1029 = vmatpush1.msra.mxu0 0.0
      %1030 = vmatprep.subr.mxu0 0.0
      %1031 = vmatpush1.msra.mxu0 0.0
      %1032 = vmatprep.subr.mxu0 0.0
      %1033 = vmatpush1.msra.mxu0 0.0
      %1034 = vmatprep.subr.mxu0 0.0
      %1035 = vmatpush1.msra.mxu0 0.0
      %1036 = vmatprep.subr.mxu0 0.0
      %1037 = vmatpush1.msra.mxu0 0.0
      %1038 = vmatprep.subr.mxu0 0.0
      %1039 = vmatpush1.msra.mxu0 0.0
      %1040 = vmatprep.subr.mxu0 0.0
      %1041 = vmatpush1.msra.mxu0 0.0
      %1042 = vmatprep.subr.mxu0 0.0
      %1043 = vmatpush1.msra.mxu0 0.0
      %1044 = vmatprep.subr.mxu0 0.0
      %1045 = vmatpush1.msra.mxu0 0.0
      %1046 = vmatprep.subr.mxu0 0.0
      %1047 = vmatpush1.msra.mxu0 0.0
      %1048 = vmatprep.subr.mxu0 0.0
      %1049 = vmatpush1.msra.mxu0 0.0
      %1050 = vmatprep.subr.mxu0 0.0
      %1051 = vmatpush1.msra.mxu0 0.0
      %1052 = vmatprep.subr.mxu0 0.0
      %1053 = vmatpush1.msra.mxu0 0.0
      %1054 = vmatprep.subr.mxu0 0.0
      %1055 = vmatpush1.msra.mxu0 0.0
      %1056 = vmatprep.subr.mxu0 0.0
      %1057 = vmatpush1.msra.mxu0 0.0
      %1058 = vmatprep.subr.mxu0 0.0
      %1059 = vmatpush1.msra.mxu0 0.0
      %1060 = vmatprep.subr.mxu0 0.0
      %1061 = vmatpush1.msra.mxu0 0.0
      %1062 = vmatprep.subr.mxu0 0.0
      %1063 = vmatpush1.msra.mxu0 0.0
      %1064 = vmatprep.subr.mxu0 0.0
      %1065 = vmatpush1.msra.mxu0 0.0
      %1066 = vmatprep.subr.mxu0 0.0
      %1067 = vmatpush1.msra.mxu0 0.0
      %1068 = vmatprep.subr.mxu0 0.0
      %1069 = vmatpush1.msra.mxu0 0.0
      %1070 = vmatprep.subr.mxu0 0.0
      %1071 = vmatpush1.msra.mxu0 0.0
      %1072 = vmatprep.subr.mxu0 0.0
      %1073 = vmatpush1.msra.mxu0 0.0
      %1074 = vmatprep.subr.mxu0 0.0
      %1075 = vmatpush1.msra.mxu0 0.0
      %1076 = vmatprep.subr.mxu0 0.0
      %1077 = vmatpush1.msra.mxu0 0.0
      %1078 = vmatprep.subr.mxu0 0.0
      %1079 = vmatpush1.msra.mxu0 0.0
      %1080 = vmatprep.mubr.f32.mxu0 0.0
      %1081 = vmatmul.mubr.f32.gmra.mrb[0].mxu0 %v1011
      %v1082 = vpop.f32.mrb[0].mxu0
      %v1083 = vadd.f32 0.0, %v1082
      %v1084 = vpop.f32.mrb[0].mxu0
      %1085 = vmatprep.mubr.f32.mxu0 0.0
      %1086 = vmatmul.mubr.f32.gmra.mrb[0].mxu0 %v1014
      %v1087 = vpop.f32.mrb[0].mxu0
      %v1088 = vadd.f32 0.0, %v1087
      %v1089 = vpop.f32.mrb[0].mxu0
      %1090 = vdwg.mxu0
      %v1091 = vadd.f32 %v1006, %v1083
      %v1092 = vadd.f32 %v1007, %v1088
      %s1093 = scalar_lea.vmem %s5, 32
      %v1094 = vld [vmem:[%s1093] sm:$0xff]
      %v1096 = vsel %vm760, %v747, 0
      %v1099 = vsel %vm760, %v748, 0
      %1101 = vmatprep.subr.mxu0 0.0
      %1102 = vmatpush1.msra.mxu0 %v1094
      %1103 = vmatprep.subr.mxu0 0.0
      %1104 = vmatpush1.msra.mxu0 0.0
      %1105 = vmatprep.subr.mxu0 0.0
      %1106 = vmatpush1.msra.mxu0 0.0
      %1107 = vmatprep.subr.mxu0 0.0
      %1108 = vmatpush1.msra.mxu0 0.0
      %1109 = vmatprep.subr.mxu0 0.0
      %1110 = vmatpush1.msra.mxu0 0.0
      %1111 = vmatprep.subr.mxu0 0.0
      %1112 = vmatpush1.msra.mxu0 0.0
      %1113 = vmatprep.subr.mxu0 0.0
      %1114 = vmatpush1.msra.mxu0 0.0
      %1115 = vmatprep.subr.mxu0 0.0
      %1116 = vmatpush1.msra.mxu0 0.0
      %1117 = vmatprep.subr.mxu0 0.0
      %1118 = vmatpush1.msra.mxu0 0.0
      %1119 = vmatprep.subr.mxu0 0.0
      %1120 = vmatpush1.msra.mxu0 0.0
      %1121 = vmatprep.subr.mxu0 0.0
      %1122 = vmatpush1.msra.mxu0 0.0
      %1123 = vmatprep.subr.mxu0 0.0
      %1124 = vmatpush1.msra.mxu0 0.0
      %1125 = vmatprep.subr.mxu0 0.0
      %1126 = vmatpush1.msra.mxu0 0.0
      %1127 = vmatprep.subr.mxu0 0.0
      %1128 = vmatpush1.msra.mxu0 0.0
      %1129 = vmatprep.subr.mxu0 0.0
      %1130 = vmatpush1.msra.mxu0 0.0
      %1131 = vmatprep.subr.mxu0 0.0
      %1132 = vmatpush1.msra.mxu0 0.0
      %1133 = vmatprep.subr.mxu0 0.0
      %1134 = vmatpush1.msra.mxu0 0.0
      %1135 = vmatprep.subr.mxu0 0.0
      %1136 = vmatpush1.msra.mxu0 0.0
      %1137 = vmatprep.subr.mxu0 0.0
      %1138 = vmatpush1.msra.mxu0 0.0
      %1139 = vmatprep.subr.mxu0 0.0
      %1140 = vmatpush1.msra.mxu0 0.0
      %1141 = vmatprep.subr.mxu0 0.0
      %1142 = vmatpush1.msra.mxu0 0.0
      %1143 = vmatprep.subr.mxu0 0.0
      %1144 = vmatpush1.msra.mxu0 0.0
      %1145 = vmatprep.subr.mxu0 0.0
      %1146 = vmatpush1.msra.mxu0 0.0
      %1147 = vmatprep.subr.mxu0 0.0
      %1148 = vmatpush1.msra.mxu0 0.0
      %1149 = vmatprep.subr.mxu0 0.0
      %1150 = vmatpush1.msra.mxu0 0.0
      %1151 = vmatprep.subr.mxu0 0.0
      %1152 = vmatpush1.msra.mxu0 0.0
      %1153 = vmatprep.subr.mxu0 0.0
      %1154 = vmatpush1.msra.mxu0 0.0
      %1155 = vmatprep.subr.mxu0 0.0
      %1156 = vmatpush1.msra.mxu0 0.0
      %1157 = vmatprep.subr.mxu0 0.0
      %1158 = vmatpush1.msra.mxu0 0.0
      %1159 = vmatprep.subr.mxu0 0.0
      %1160 = vmatpush1.msra.mxu0 0.0
      %1161 = vmatprep.subr.mxu0 0.0
      %1162 = vmatpush1.msra.mxu0 0.0
      %1163 = vmatprep.subr.mxu0 0.0
      %1164 = vmatpush1.msra.mxu0 0.0
      %1165 = vmatprep.mubr.f32.mxu0 0.0
      %1166 = vmatmul.mubr.f32.gmra.mrb[0].mxu0 %v1096
      %v1167 = vpop.f32.mrb[0].mxu0
      %v1168 = vadd.f32 0.0, %v1167
      %v1169 = vpop.f32.mrb[0].mxu0
      %1170 = vmatprep.mubr.f32.mxu0 0.0
      %1171 = vmatmul.mubr.f32.gmra.mrb[0].mxu0 %v1099
      %v1172 = vpop.f32.mrb[0].mxu0
      %v1173 = vadd.f32 0.0, %v1172
      %v1174 = vpop.f32.mrb[0].mxu0
      %1175 = vdwg.mxu0
      %v1176 = vadd.f32 %v1091, %v1168
      %v1177 = vadd.f32 %v1092, %v1173
      %s1178 = scalar_lea.vmem %s5, 40
      %v1179 = vld [vmem:[%s1178] sm:$0xff]
      %v1181 = vsel %vm760, %v749, 0
      %v1184 = vsel %vm760, %v750, 0
      %1186 = vmatprep.subr.mxu0 0.0
      %1187 = vmatpush1.msra.mxu0 %v1179
      %1188 = vmatprep.subr.mxu0 0.0
      %1189 = vmatpush1.msra.mxu0 0.0
      %1190 = vmatprep.subr.mxu0 0.0
      %1191 = vmatpush1.msra.mxu0 0.0
      %1192 = vmatprep.subr.mxu0 0.0
      %1193 = vmatpush1.msra.mxu0 0.0
      %1194 = vmatprep.subr.mxu0 0.0
      %1195 = vmatpush1.msra.mxu0 0.0
      %1196 = vmatprep.subr.mxu0 0.0
      %1197 = vmatpush1.msra.mxu0 0.0
      %1198 = vmatprep.subr.mxu0 0.0
      %1199 = vmatpush1.msra.mxu0 0.0
      %1200 = vmatprep.subr.mxu0 0.0
      %1201 = vmatpush1.msra.mxu0 0.0
      %1202 = vmatprep.subr.mxu0 0.0
      %1203 = vmatpush1.msra.mxu0 0.0
      %1204 = vmatprep.subr.mxu0 0.0
      %1205 = vmatpush1.msra.mxu0 0.0
      %1206 = vmatprep.subr.mxu0 0.0
      %1207 = vmatpush1.msra.mxu0 0.0
      %1208 = vmatprep.subr.mxu0 0.0
      %1209 = vmatpush1.msra.mxu0 0.0
      %1210 = vmatprep.subr.mxu0 0.0
      %1211 = vmatpush1.msra.mxu0 0.0
      %1212 = vmatprep.subr.mxu0 0.0
      %1213 = vmatpush1.msra.mxu0 0.0
      %1214 = vmatprep.subr.mxu0 0.0
      %1215 = vmatpush1.msra.mxu0 0.0
      %1216 = vmatprep.subr.mxu0 0.0
      %1217 = vmatpush1.msra.mxu0 0.0
      %1218 = vmatprep.subr.mxu0 0.0
      %1219 = vmatpush1.msra.mxu0 0.0
      %1220 = vmatprep.subr.mxu0 0.0
      %1221 = vmatpush1.msra.mxu0 0.0
      %1222 = vmatprep.subr.mxu0 0.0
      %1223 = vmatpush1.msra.mxu0 0.0
      %1224 = vmatprep.subr.mxu0 0.0
      %1225 = vmatpush1.msra.mxu0 0.0
      %1226 = vmatprep.subr.mxu0 0.0
      %1227 = vmatpush1.msra.mxu0 0.0
      %1228 = vmatprep.subr.mxu0 0.0
      %1229 = vmatpush1.msra.mxu0 0.0
      %1230 = vmatprep.subr.mxu0 0.0
      %1231 = vmatpush1.msra.mxu0 0.0
      %1232 = vmatprep.subr.mxu0 0.0
      %1233 = vmatpush1.msra.mxu0 0.0
      %1234 = vmatprep.subr.mxu0 0.0
      %1235 = vmatpush1.msra.mxu0 0.0
      %1236 = vmatprep.subr.mxu0 0.0
      %1237 = vmatpush1.msra.mxu0 0.0
      %1238 = vmatprep.subr.mxu0 0.0
      %1239 = vmatpush1.msra.mxu0 0.0
      %1240 = vmatprep.subr.mxu0 0.0
      %1241 = vmatpush1.msra.mxu0 0.0
      %1242 = vmatprep.subr.mxu0 0.0
      %1243 = vmatpush1.msra.mxu0 0.0
      %1244 = vmatprep.subr.mxu0 0.0
      %1245 = vmatpush1.msra.mxu0 0.0
      %1246 = vmatprep.subr.mxu0 0.0
      %1247 = vmatpush1.msra.mxu0 0.0
      %1248 = vmatprep.subr.mxu0 0.0
      %1249 = vmatpush1.msra.mxu0 0.0
      %1250 = vmatprep.mubr.f32.mxu0 0.0
      %1251 = vmatmul.mubr.f32.gmra.mrb[0].mxu0 %v1181
      %v1252 = vpop.f32.mrb[0].mxu0
      %v1253 = vadd.f32 0.0, %v1252
      %v1254 = vpop.f32.mrb[0].mxu0
      %1255 = vmatprep.mubr.f32.mxu0 0.0
      %1256 = vmatmul.mubr.f32.gmra.mrb[0].mxu0 %v1184
      %v1257 = vpop.f32.mrb[0].mxu0
      %v1258 = vadd.f32 0.0, %v1257
      %v1259 = vpop.f32.mrb[0].mxu0
      %1260 = vdwg.mxu0
      %v1261 = vadd.f32 %v1176, %v1253
      %v1262 = vadd.f32 %v1177, %v1258
      %s1263 = scalar_lea.vmem %s5, 48
      %v1264 = vld [vmem:[%s1263] sm:$0xff]
      %v1266 = vsel %vm760, %v751, 0
      %v1269 = vsel %vm760, %v752, 0
      %1271 = vmatprep.subr.mxu0 0.0
      %1272 = vmatpush1.msra.mxu0 %v1264
      %1273 = vmatprep.subr.mxu0 0.0
      %1274 = vmatpush1.msra.mxu0 0.0
      %1275 = vmatprep.subr.mxu0 0.0
      %1276 = vmatpush1.msra.mxu0 0.0
      %1277 = vmatprep.subr.mxu0 0.0
      %1278 = vmatpush1.msra.mxu0 0.0
      %1279 = vmatprep.subr.mxu0 0.0
      %1280 = vmatpush1.msra.mxu0 0.0
      %1281 = vmatprep.subr.mxu0 0.0
      %1282 = vmatpush1.msra.mxu0 0.0
      %1283 = vmatprep.subr.mxu0 0.0
      %1284 = vmatpush1.msra.mxu0 0.0
      %1285 = vmatprep.subr.mxu0 0.0
      %1286 = vmatpush1.msra.mxu0 0.0
      %1287 = vmatprep.subr.mxu0 0.0
      %1288 = vmatpush1.msra.mxu0 0.0
      %1289 = vmatprep.subr.mxu0 0.0
      %1290 = vmatpush1.msra.mxu0 0.0
      %1291 = vmatprep.subr.mxu0 0.0
      %1292 = vmatpush1.msra.mxu0 0.0
      %1293 = vmatprep.subr.mxu0 0.0
      %1294 = vmatpush1.msra.mxu0 0.0
      %1295 = vmatprep.subr.mxu0 0.0
      %1296 = vmatpush1.msra.mxu0 0.0
      %1297 = vmatprep.subr.mxu0 0.0
      %1298 = vmatpush1.msra.mxu0 0.0
      %1299 = vmatprep.subr.mxu0 0.0
      %1300 = vmatpush1.msra.mxu0 0.0
      %1301 = vmatprep.subr.mxu0 0.0
      %1302 = vmatpush1.msra.mxu0 0.0
      %1303 = vmatprep.subr.mxu0 0.0
      %1304 = vmatpush1.msra.mxu0 0.0
      %1305 = vmatprep.subr.mxu0 0.0
      %1306 = vmatpush1.msra.mxu0 0.0
      %1307 = vmatprep.subr.mxu0 0.0
      %1308 = vmatpush1.msra.mxu0 0.0
      %1309 = vmatprep.subr.mxu0 0.0
      %1310 = vmatpush1.msra.mxu0 0.0
      %1311 = vmatprep.subr.mxu0 0.0
      %1312 = vmatpush1.msra.mxu0 0.0
      %1313 = vmatprep.subr.mxu0 0.0
      %1314 = vmatpush1.msra.mxu0 0.0
      %1315 = vmatprep.subr.mxu0 0.0
      %1316 = vmatpush1.msra.mxu0 0.0
      %1317 = vmatprep.subr.mxu0 0.0
      %1318 = vmatpush1.msra.mxu0 0.0
      %1319 = vmatprep.subr.mxu0 0.0
      %1320 = vmatpush1.msra.mxu0 0.0
      %1321 = vmatprep.subr.mxu0 0.0
      %1322 = vmatpush1.msra.mxu0 0.0
      %1323 = vmatprep.subr.mxu0 0.0
      %1324 = vmatpush1.msra.mxu0 0.0
      %1325 = vmatprep.subr.mxu0 0.0
      %1326 = vmatpush1.msra.mxu0 0.0
      %1327 = vmatprep.subr.mxu0 0.0
      %1328 = vmatpush1.msra.mxu0 0.0
      %1329 = vmatprep.subr.mxu0 0.0
      %1330 = vmatpush1.msra.mxu0 0.0
      %1331 = vmatprep.subr.mxu0 0.0
      %1332 = vmatpush1.msra.mxu0 0.0
      %1333 = vmatprep.subr.mxu0 0.0
      %1334 = vmatpush1.msra.mxu0 0.0
      %1335 = vmatprep.mubr.f32.mxu0 0.0
      %1336 = vmatmul.mubr.f32.gmra.mrb[0].mxu0 %v1266
      %v1337 = vpop.f32.mrb[0].mxu0
      %v1338 = vadd.f32 0.0, %v1337
      %v1339 = vpop.f32.mrb[0].mxu0
      %1340 = vmatprep.mubr.f32.mxu0 0.0
      %1341 = vmatmul.mubr.f32.gmra.mrb[0].mxu0 %v1269
      %v1342 = vpop.f32.mrb[0].mxu0
      %v1343 = vadd.f32 0.0, %v1342
      %v1344 = vpop.f32.mrb[0].mxu0
      %1345 = vdwg.mxu0
      %v1346 = vadd.f32 %v1261, %v1338
      %v1347 = vadd.f32 %v1262, %v1343
      %s1348 = scalar_lea.vmem %s5, 56
      %v1349 = vld [vmem:[%s1348] sm:$0xff]
      %v1351 = vsel %vm760, %v753, 0
      %v1354 = vsel %vm760, %v754, 0
      %1356 = vmatprep.subr.mxu0 0.0
      %1357 = vmatpush1.msra.mxu0 %v1349
      %1358 = vmatprep.subr.mxu0 0.0
      %1359 = vmatpush1.msra.mxu0 0.0
      %1360 = vmatprep.subr.mxu0 0.0
      %1361 = vmatpush1.msra.mxu0 0.0
      %1362 = vmatprep.subr.mxu0 0.0
      %1363 = vmatpush1.msra.mxu0 0.0
      %1364 = vmatprep.subr.mxu0 0.0
      %1365 = vmatpush1.msra.mxu0 0.0
      %1366 = vmatprep.subr.mxu0 0.0
      %1367 = vmatpush1.msra.mxu0 0.0
      %1368 = vmatprep.subr.mxu0 0.0
      %1369 = vmatpush1.msra.mxu0 0.0
      %1370 = vmatprep.subr.mxu0 0.0
      %1371 = vmatpush1.msra.mxu0 0.0
      %1372 = vmatprep.subr.mxu0 0.0
      %1373 = vmatpush1.msra.mxu0 0.0
      %1374 = vmatprep.subr.mxu0 0.0
      %1375 = vmatpush1.msra.mxu0 0.0
      %1376 = vmatprep.subr.mxu0 0.0
      %1377 = vmatpush1.msra.mxu0 0.0
      %1378 = vmatprep.subr.mxu0 0.0
      %1379 = vmatpush1.msra.mxu0 0.0
      %1380 = vmatprep.subr.mxu0 0.0
      %1381 = vmatpush1.msra.mxu0 0.0
      %1382 = vmatprep.subr.mxu0 0.0
      %1383 = vmatpush1.msra.mxu0 0.0
      %1384 = vmatprep.subr.mxu0 0.0
      %1385 = vmatpush1.msra.mxu0 0.0
      %1386 = vmatprep.subr.mxu0 0.0
      %1387 = vmatpush1.msra.mxu0 0.0
      %1388 = vmatprep.subr.mxu0 0.0
      %1389 = vmatpush1.msra.mxu0 0.0
      %1390 = vmatprep.subr.mxu0 0.0
      %1391 = vmatpush1.msra.mxu0 0.0
      %1392 = vmatprep.subr.mxu0 0.0
      %1393 = vmatpush1.msra.mxu0 0.0
      %1394 = vmatprep.subr.mxu0 0.0
      %1395 = vmatpush1.msra.mxu0 0.0
      %1396 = vmatprep.subr.mxu0 0.0
      %1397 = vmatpush1.msra.mxu0 0.0
      %1398 = vmatprep.subr.mxu0 0.0
      %1399 = vmatpush1.msra.mxu0 0.0
      %1400 = vmatprep.subr.mxu0 0.0
      %1401 = vmatpush1.msra.mxu0 0.0
      %1402 = vmatprep.subr.mxu0 0.0
      %1403 = vmatpush1.msra.mxu0 0.0
      %1404 = vmatprep.subr.mxu0 0.0
      %1405 = vmatpush1.msra.mxu0 0.0
      %1406 = vmatprep.subr.mxu0 0.0
      %1407 = vmatpush1.msra.mxu0 0.0
      %1408 = vmatprep.subr.mxu0 0.0
      %1409 = vmatpush1.msra.mxu0 0.0
      %1410 = vmatprep.subr.mxu0 0.0
      %1411 = vmatpush1.msra.mxu0 0.0
      %1412 = vmatprep.subr.mxu0 0.0
      %1413 = vmatpush1.msra.mxu0 0.0
      %1414 = vmatprep.subr.mxu0 0.0
      %1415 = vmatpush1.msra.mxu0 0.0
      %1416 = vmatprep.subr.mxu0 0.0
      %1417 = vmatpush1.msra.mxu0 0.0
      %1418 = vmatprep.subr.mxu0 0.0
      %1419 = vmatpush1.msra.mxu0 0.0
      %1420 = vmatprep.mubr.f32.mxu0 0.0
      %1421 = vmatmul.mubr.f32.gmra.mrb[0].mxu0 %v1351
      %v1422 = vpop.f32.mrb[0].mxu0
      %v1423 = vadd.f32 0.0, %v1422
      %v1424 = vpop.f32.mrb[0].mxu0
      %1425 = vmatprep.mubr.f32.mxu0 0.0
      %1426 = vmatmul.mubr.f32.gmra.mrb[0].mxu0 %v1354
      %v1427 = vpop.f32.mrb[0].mxu0
      %v1428 = vadd.f32 0.0, %v1427
      %v1429 = vpop.f32.mrb[0].mxu0
      %1430 = vdwg.mxu0
      %v1431 = vadd.f32 %v1346, %v1423
      %v1432 = vadd.f32 %v1347, %v1428
      %s1433 = scalar_lea.vmem %s5, 64
      %v1434 = vld [vmem:[%s1433] sm:$0xff]
      %v1436 = vsel %vm760, %v755, 0
      %v1439 = vsel %vm760, %v756, 0
      %1441 = vmatprep.subr.mxu0 0.0
      %1442 = vmatpush1.msra.mxu0 %v1434
      %1443 = vmatprep.subr.mxu0 0.0
      %1444 = vmatpush1.msra.mxu0 0.0
      %1445 = vmatprep.subr.mxu0 0.0
      %1446 = vmatpush1.msra.mxu0 0.0
      %1447 = vmatprep.subr.mxu0 0.0
      %1448 = vmatpush1.msra.mxu0 0.0
      %1449 = vmatprep.subr.mxu0 0.0
      %1450 = vmatpush1.msra.mxu0 0.0
      %1451 = vmatprep.subr.mxu0 0.0
      %1452 = vmatpush1.msra.mxu0 0.0
      %1453 = vmatprep.subr.mxu0 0.0
      %1454 = vmatpush1.msra.mxu0 0.0
      %1455 = vmatprep.subr.mxu0 0.0
      %1456 = vmatpush1.msra.mxu0 0.0
      %1457 = vmatprep.subr.mxu0 0.0
      %1458 = vmatpush1.msra.mxu0 0.0
      %1459 = vmatprep.subr.mxu0 0.0
      %1460 = vmatpush1.msra.mxu0 0.0
      %1461 = vmatprep.subr.mxu0 0.0
      %1462 = vmatpush1.msra.mxu0 0.0
      %1463 = vmatprep.subr.mxu0 0.0
      %1464 = vmatpush1.msra.mxu0 0.0
      %1465 = vmatprep.subr.mxu0 0.0
      %1466 = vmatpush1.msra.mxu0 0.0
      %1467 = vmatprep.subr.mxu0 0.0
      %1468 = vmatpush1.msra.mxu0 0.0
      %1469 = vmatprep.subr.mxu0 0.0
      %1470 = vmatpush1.msra.mxu0 0.0
      %1471 = vmatprep.subr.mxu0 0.0
      %1472 = vmatpush1.msra.mxu0 0.0
      %1473 = vmatprep.subr.mxu0 0.0
      %1474 = vmatpush1.msra.mxu0 0.0
      %1475 = vmatprep.subr.mxu0 0.0
      %1476 = vmatpush1.msra.mxu0 0.0
      %1477 = vmatprep.subr.mxu0 0.0
      %1478 = vmatpush1.msra.mxu0 0.0
      %1479 = vmatprep.subr.mxu0 0.0
      %1480 = vmatpush1.msra.mxu0 0.0
      %1481 = vmatprep.subr.mxu0 0.0
      %1482 = vmatpush1.msra.mxu0 0.0
      %1483 = vmatprep.subr.mxu0 0.0
      %1484 = vmatpush1.msra.mxu0 0.0
      %1485 = vmatprep.subr.mxu0 0.0
      %1486 = vmatpush1.msra.mxu0 0.0
      %1487 = vmatprep.subr.mxu0 0.0
      %1488 = vmatpush1.msra.mxu0 0.0
      %1489 = vmatprep.subr.mxu0 0.0
      %1490 = vmatpush1.msra.mxu0 0.0
      %1491 = vmatprep.subr.mxu0 0.0
      %1492 = vmatpush1.msra.mxu0 0.0
      %1493 = vmatprep.subr.mxu0 0.0
      %1494 = vmatpush1.msra.mxu0 0.0
      %1495 = vmatprep.subr.mxu0 0.0
      %1496 = vmatpush1.msra.mxu0 0.0
      %1497 = vmatprep.subr.mxu0 0.0
      %1498 = vmatpush1.msra.mxu0 0.0
      %1499 = vmatprep.subr.mxu0 0.0
      %1500 = vmatpush1.msra.mxu0 0.0
      %1501 = vmatprep.subr.mxu0 0.0
      %1502 = vmatpush1.msra.mxu0 0.0
      %1503 = vmatprep.subr.mxu0 0.0
      %1504 = vmatpush1.msra.mxu0 0.0
      %1505 = vmatprep.mubr.f32.mxu0 0.0
      %1506 = vmatmul.mubr.f32.gmra.mrb[0].mxu0 %v1436
      %v1507 = vpop.f32.mrb[0].mxu0
      %v1508 = vadd.f32 0.0, %v1507
      %v1509 = vpop.f32.mrb[0].mxu0
      %1510 = vmatprep.mubr.f32.mxu0 0.0
      %1511 = vmatmul.mubr.f32.gmra.mrb[0].mxu0 %v1439
      %v1512 = vpop.f32.mrb[0].mxu0
      %v1513 = vadd.f32 0.0, %v1512
      %v1514 = vpop.f32.mrb[0].mxu0
      %1515 = vdwg.mxu0
      %v1516 = vadd.f32 %v1431, %v1508
      %v1517 = vadd.f32 %v1432, %v1513
      %v1519 = vlaneseq
      %v1520 = vshrl.u32 %v1519, 7
      %v1521 = vsub.s32 0, %v1520
      %v1522 = vrot.slane %v447, %v1521
      %v1524 = vadd.f32 %v1516, %v1522
      %v1525 = vadd.f32 %v1517, %v1522
      %v1526 = vmax.f32 %v1524, 0.0
      %v1527 = vmax.f32 %v1525, 0.0
      %v1529 = vlaneseq
      %v1530 = vshrl.u32 %v1529, 7
      %v1531 = vsub.s32 0, %v1530
      %v1532 = vrot.slane %v448, %v1531
      %v1534 = vmul.f32 %v1526, %v1532
      %v1535 = vmul.f32 %v1527, %v1532
      %v1537 = vlaneseq
      %v1538 = vshrl.u32 %v1537, 7
      %v1539 = vsub.s32 0, %v1538
      %v1540 = vrot.slane %v449, %v1539
      %v1542 = vadd.f32 %v1534, %v1540
      %v1543 = vadd.f32 %v1535, %v1540
      %v1544 = vld [vmem:[%s9] sm:$0xff]
      %v1545 = vld [vmem:[%s9 + $0x8] sm:$0xff]
      %s1546 = scalar_lea.vmem %s9, 16
      %v1547 = vld [vmem:[%s1546] sm:$0xff]
      %v1548 = vld [vmem:[%s1546 + $0x8] sm:$0xff]
      %v1550 = vrot.slane %v1542, 1
      %vm1551 = vcmask 130048
      %v1552 = vsel %vm1551, %v1550, 0
      %1554 = vmatprep.subr.mxu0 0.0
      %1555 = vmatpush1.msra.mxu0 %v1547
      %1556 = vmatprep.subr.mxu0 0.0
      %1557 = vmatpush1.msra.mxu0 %v1548
      %1558 = vmatprep.subr.mxu0 0.0
      %1559 = vmatpush1.msra.mxu0 0.0
      %1560 = vmatprep.subr.mxu0 0.0
      %1561 = vmatpush1.msra.mxu0 0.0
      %1562 = vmatprep.subr.mxu0 0.0
      %1563 = vmatpush1.msra.mxu0 0.0
      %1564 = vmatprep.subr.mxu0 0.0
      %1565 = vmatpush1.msra.mxu0 0.0
      %1566 = vmatprep.subr.mxu0 0.0
      %1567 = vmatpush1.msra.mxu0 0.0
      %1568 = vmatprep.subr.mxu0 0.0
      %1569 = vmatpush1.msra.mxu0 0.0
      %1570 = vmatprep.subr.mxu0 0.0
      %1571 = vmatpush1.msra.mxu0 0.0
      %1572 = vmatprep.subr.mxu0 0.0
      %1573 = vmatpush1.msra.mxu0 0.0
      %1574 = vmatprep.subr.mxu0 0.0
      %1575 = vmatpush1.msra.mxu0 0.0
      %1576 = vmatprep.subr.mxu0 0.0
      %1577 = vmatpush1.msra.mxu0 0.0
      %1578 = vmatprep.subr.mxu0 0.0
      %1579 = vmatpush1.msra.mxu0 0.0
      %1580 = vmatprep.subr.mxu0 0.0
      %1581 = vmatpush1.msra.mxu0 0.0
      %1582 = vmatprep.subr.mxu0 0.0
      %1583 = vmatpush1.msra.mxu0 0.0
      %1584 = vmatprep.subr.mxu0 0.0
      %1585 = vmatpush1.msra.mxu0 0.0
      %1586 = vmatprep.subr.mxu0 0.0
      %1587 = vmatpush1.msra.mxu0 0.0
      %1588 = vmatprep.subr.mxu0 0.0
      %1589 = vmatpush1.msra.mxu0 0.0
      %1590 = vmatprep.subr.mxu0 0.0
      %1591 = vmatpush1.msra.mxu0 0.0
      %1592 = vmatprep.subr.mxu0 0.0
      %1593 = vmatpush1.msra.mxu0 0.0
      %1594 = vmatprep.subr.mxu0 0.0
      %1595 = vmatpush1.msra.mxu0 0.0
      %1596 = vmatprep.subr.mxu0 0.0
      %1597 = vmatpush1.msra.mxu0 0.0
      %1598 = vmatprep.subr.mxu0 0.0
      %1599 = vmatpush1.msra.mxu0 0.0
      %1600 = vmatprep.subr.mxu0 0.0
      %1601 = vmatpush1.msra.mxu0 0.0
      %1602 = vmatprep.subr.mxu0 0.0
      %1603 = vmatpush1.msra.mxu0 0.0
      %1604 = vmatprep.subr.mxu0 0.0
      %1605 = vmatpush1.msra.mxu0 0.0
      %1606 = vmatprep.subr.mxu0 0.0
      %1607 = vmatpush1.msra.mxu0 0.0
      %1608 = vmatprep.subr.mxu0 0.0
      %1609 = vmatpush1.msra.mxu0 0.0
      %1610 = vmatprep.subr.mxu0 0.0
      %1611 = vmatpush1.msra.mxu0 0.0
      %1612 = vmatprep.subr.mxu0 0.0
      %1613 = vmatpush1.msra.mxu0 0.0
      %1614 = vmatprep.subr.mxu0 0.0
      %1615 = vmatpush1.msra.mxu0 0.0
      %1616 = vmatprep.subr.mxu0 0.0
      %1617 = vmatpush1.msra.mxu0 0.0
      %1618 = vmatprep.mubr.f32.mxu0 0.0
      %1619 = vmatmul.mubr.f32.gmra.mrb[0].mxu0 %v1552
      %v1620 = vpop.f32.mrb[0].mxu0
      %v1621 = vadd.f32 0.0, %v1620
      %v1622 = vpop.f32.mrb[0].mxu0
      %1623 = vdwg.mxu0
      %v1624 = vsel %vm1551, %v1542, 0
      %1626 = vmatprep.subr.mxu0 0.0
      %1627 = vmatpush1.msra.mxu0 %v1544
      %1628 = vmatprep.subr.mxu0 0.0
      %1629 = vmatpush1.msra.mxu0 %v1545
      %1630 = vmatprep.subr.mxu0 0.0
      %1631 = vmatpush1.msra.mxu0 0.0
      %1632 = vmatprep.subr.mxu0 0.0
      %1633 = vmatpush1.msra.mxu0 0.0
      %1634 = vmatprep.subr.mxu0 0.0
      %1635 = vmatpush1.msra.mxu0 0.0
      %1636 = vmatprep.subr.mxu0 0.0
      %1637 = vmatpush1.msra.mxu0 0.0
      %1638 = vmatprep.subr.mxu0 0.0
      %1639 = vmatpush1.msra.mxu0 0.0
      %1640 = vmatprep.subr.mxu0 0.0
      %1641 = vmatpush1.msra.mxu0 0.0
      %1642 = vmatprep.subr.mxu0 0.0
      %1643 = vmatpush1.msra.mxu0 0.0
      %1644 = vmatprep.subr.mxu0 0.0
      %1645 = vmatpush1.msra.mxu0 0.0
      %1646 = vmatprep.subr.mxu0 0.0
      %1647 = vmatpush1.msra.mxu0 0.0
      %1648 = vmatprep.subr.mxu0 0.0
      %1649 = vmatpush1.msra.mxu0 0.0
      %1650 = vmatprep.subr.mxu0 0.0
      %1651 = vmatpush1.msra.mxu0 0.0
      %1652 = vmatprep.subr.mxu0 0.0
      %1653 = vmatpush1.msra.mxu0 0.0
      %1654 = vmatprep.subr.mxu0 0.0
      %1655 = vmatpush1.msra.mxu0 0.0
      %1656 = vmatprep.subr.mxu0 0.0
      %1657 = vmatpush1.msra.mxu0 0.0
      %1658 = vmatprep.subr.mxu0 0.0
      %1659 = vmatpush1.msra.mxu0 0.0
      %1660 = vmatprep.subr.mxu0 0.0
      %1661 = vmatpush1.msra.mxu0 0.0
      %1662 = vmatprep.subr.mxu0 0.0
      %1663 = vmatpush1.msra.mxu0 0.0
      %1664 = vmatprep.subr.mxu0 0.0
      %1665 = vmatpush1.msra.mxu0 0.0
      %1666 = vmatprep.subr.mxu0 0.0
      %1667 = vmatpush1.msra.mxu0 0.0
      %1668 = vmatprep.subr.mxu0 0.0
      %1669 = vmatpush1.msra.mxu0 0.0
      %1670 = vmatprep.subr.mxu0 0.0
      %1671 = vmatpush1.msra.mxu0 0.0
      %1672 = vmatprep.subr.mxu0 0.0
      %1673 = vmatpush1.msra.mxu0 0.0
      %1674 = vmatprep.subr.mxu0 0.0
      %1675 = vmatpush1.msra.mxu0 0.0
      %1676 = vmatprep.subr.mxu0 0.0
      %1677 = vmatpush1.msra.mxu0 0.0
      %1678 = vmatprep.subr.mxu0 0.0
      %1679 = vmatpush1.msra.mxu0 0.0
      %1680 = vmatprep.subr.mxu0 0.0
      %1681 = vmatpush1.msra.mxu0 0.0
      %1682 = vmatprep.subr.mxu0 0.0
      %1683 = vmatpush1.msra.mxu0 0.0
      %1684 = vmatprep.subr.mxu0 0.0
      %1685 = vmatpush1.msra.mxu0 0.0
      %1686 = vmatprep.subr.mxu0 0.0
      %1687 = vmatpush1.msra.mxu0 0.0
      %1688 = vmatprep.subr.mxu0 0.0
      %1689 = vmatpush1.msra.mxu0 0.0
      %1690 = vmatprep.mubr.f32.mxu0 0.0
      %1691 = vmatmul.mubr.f32.gmra.mrb[0].mxu0 %v1624
      %v1692 = vpop.f32.mrb[0].mxu0
      %v1693 = vadd.f32 %v1621, %v1692
      %v1694 = vpop.f32.mrb[0].mxu0
      %1695 = vdwg.mxu0
      %s1696 = scalar_lea.vmem %s9, 32
      %v1697 = vld [vmem:[%s1696] sm:$0xff]
      %v1698 = vld [vmem:[%s1696 + $0x8] sm:$0xff]
      %v1699 = vrot.slane %v1542, 2
      %v1700 = vsel %vm1551, %v1699, 0
      %1702 = vmatprep.subr.mxu0 0.0
      %1703 = vmatpush1.msra.mxu0 %v1697
      %1704 = vmatprep.subr.mxu0 0.0
      %1705 = vmatpush1.msra.mxu0 %v1698
      %1706 = vmatprep.subr.mxu0 0.0
      %1707 = vmatpush1.msra.mxu0 0.0
      %1708 = vmatprep.subr.mxu0 0.0
      %1709 = vmatpush1.msra.mxu0 0.0
      %1710 = vmatprep.subr.mxu0 0.0
      %1711 = vmatpush1.msra.mxu0 0.0
      %1712 = vmatprep.subr.mxu0 0.0
      %1713 = vmatpush1.msra.mxu0 0.0
      %1714 = vmatprep.subr.mxu0 0.0
      %1715 = vmatpush1.msra.mxu0 0.0
      %1716 = vmatprep.subr.mxu0 0.0
      %1717 = vmatpush1.msra.mxu0 0.0
      %1718 = vmatprep.subr.mxu0 0.0
      %1719 = vmatpush1.msra.mxu0 0.0
      %1720 = vmatprep.subr.mxu0 0.0
      %1721 = vmatpush1.msra.mxu0 0.0
      %1722 = vmatprep.subr.mxu0 0.0
      %1723 = vmatpush1.msra.mxu0 0.0
      %1724 = vmatprep.subr.mxu0 0.0
      %1725 = vmatpush1.msra.mxu0 0.0
      %1726 = vmatprep.subr.mxu0 0.0
      %1727 = vmatpush1.msra.mxu0 0.0
      %1728 = vmatprep.subr.mxu0 0.0
      %1729 = vmatpush1.msra.mxu0 0.0
      %1730 = vmatprep.subr.mxu0 0.0
      %1731 = vmatpush1.msra.mxu0 0.0
      %1732 = vmatprep.subr.mxu0 0.0
      %1733 = vmatpush1.msra.mxu0 0.0
      %1734 = vmatprep.subr.mxu0 0.0
      %1735 = vmatpush1.msra.mxu0 0.0
      %1736 = vmatprep.subr.mxu0 0.0
      %1737 = vmatpush1.msra.mxu0 0.0
      %1738 = vmatprep.subr.mxu0 0.0
      %1739 = vmatpush1.msra.mxu0 0.0
      %1740 = vmatprep.subr.mxu0 0.0
      %1741 = vmatpush1.msra.mxu0 0.0
      %1742 = vmatprep.subr.mxu0 0.0
      %1743 = vmatpush1.msra.mxu0 0.0
      %1744 = vmatprep.subr.mxu0 0.0
      %1745 = vmatpush1.msra.mxu0 0.0
      %1746 = vmatprep.subr.mxu0 0.0
      %1747 = vmatpush1.msra.mxu0 0.0
      %1748 = vmatprep.subr.mxu0 0.0
      %1749 = vmatpush1.msra.mxu0 0.0
      %1750 = vmatprep.subr.mxu0 0.0
      %1751 = vmatpush1.msra.mxu0 0.0
      %1752 = vmatprep.subr.mxu0 0.0
      %1753 = vmatpush1.msra.mxu0 0.0
      %1754 = vmatprep.subr.mxu0 0.0
      %1755 = vmatpush1.msra.mxu0 0.0
      %1756 = vmatprep.subr.mxu0 0.0
      %1757 = vmatpush1.msra.mxu0 0.0
      %1758 = vmatprep.subr.mxu0 0.0
      %1759 = vmatpush1.msra.mxu0 0.0
      %1760 = vmatprep.subr.mxu0 0.0
      %1761 = vmatpush1.msra.mxu0 0.0
      %1762 = vmatprep.subr.mxu0 0.0
      %1763 = vmatpush1.msra.mxu0 0.0
      %1764 = vmatprep.subr.mxu0 0.0
      %1765 = vmatpush1.msra.mxu0 0.0
      %1766 = vmatprep.mubr.f32.mxu0 0.0
      %1767 = vmatmul.mubr.f32.gmra.mrb[0].mxu0 %v1700
      %v1768 = vpop.f32.mrb[0].mxu0
      %v1769 = vadd.f32 0.0, %v1768
      %v1770 = vpop.f32.mrb[0].mxu0
      %1771 = vdwg.mxu0
      %v1772 = vadd.f32 %v1693, %v1769
      %s1773 = scalar_lea.vmem %s9, 48
      %v1774 = vld [vmem:[%s1773] sm:$0xff]
      %v1775 = vld [vmem:[%s1773 + $0x8] sm:$0xff]
      %v1776 = vrot.slane %v1542, 3
      %v1777 = vsel %vm1551, %v1776, 0
      %1779 = vmatprep.subr.mxu0 0.0
      %1780 = vmatpush1.msra.mxu0 %v1774
      %1781 = vmatprep.subr.mxu0 0.0
      %1782 = vmatpush1.msra.mxu0 %v1775
      %1783 = vmatprep.subr.mxu0 0.0
      %1784 = vmatpush1.msra.mxu0 0.0
      %1785 = vmatprep.subr.mxu0 0.0
      %1786 = vmatpush1.msra.mxu0 0.0
      %1787 = vmatprep.subr.mxu0 0.0
      %1788 = vmatpush1.msra.mxu0 0.0
      %1789 = vmatprep.subr.mxu0 0.0
      %1790 = vmatpush1.msra.mxu0 0.0
      %1791 = vmatprep.subr.mxu0 0.0
      %1792 = vmatpush1.msra.mxu0 0.0
      %1793 = vmatprep.subr.mxu0 0.0
      %1794 = vmatpush1.msra.mxu0 0.0
      %1795 = vmatprep.subr.mxu0 0.0
      %1796 = vmatpush1.msra.mxu0 0.0
      %1797 = vmatprep.subr.mxu0 0.0
      %1798 = vmatpush1.msra.mxu0 0.0
      %1799 = vmatprep.subr.mxu0 0.0
      %1800 = vmatpush1.msra.mxu0 0.0
      %1801 = vmatprep.subr.mxu0 0.0
      %1802 = vmatpush1.msra.mxu0 0.0
      %1803 = vmatprep.subr.mxu0 0.0
      %1804 = vmatpush1.msra.mxu0 0.0
      %1805 = vmatprep.subr.mxu0 0.0
      %1806 = vmatpush1.msra.mxu0 0.0
      %1807 = vmatprep.subr.mxu0 0.0
      %1808 = vmatpush1.msra.mxu0 0.0
      %1809 = vmatprep.subr.mxu0 0.0
      %1810 = vmatpush1.msra.mxu0 0.0
      %1811 = vmatprep.subr.mxu0 0.0
      %1812 = vmatpush1.msra.mxu0 0.0
      %1813 = vmatprep.subr.mxu0 0.0
      %1814 = vmatpush1.msra.mxu0 0.0
      %1815 = vmatprep.subr.mxu0 0.0
      %1816 = vmatpush1.msra.mxu0 0.0
      %1817 = vmatprep.subr.mxu0 0.0
      %1818 = vmatpush1.msra.mxu0 0.0
      %1819 = vmatprep.subr.mxu0 0.0
      %1820 = vmatpush1.msra.mxu0 0.0
      %1821 = vmatprep.subr.mxu0 0.0
      %1822 = vmatpush1.msra.mxu0 0.0
      %1823 = vmatprep.subr.mxu0 0.0
      %1824 = vmatpush1.msra.mxu0 0.0
      %1825 = vmatprep.subr.mxu0 0.0
      %1826 = vmatpush1.msra.mxu0 0.0
      %1827 = vmatprep.subr.mxu0 0.0
      %1828 = vmatpush1.msra.mxu0 0.0
      %1829 = vmatprep.subr.mxu0 0.0
      %1830 = vmatpush1.msra.mxu0 0.0
      %1831 = vmatprep.subr.mxu0 0.0
      %1832 = vmatpush1.msra.mxu0 0.0
      %1833 = vmatprep.subr.mxu0 0.0
      %1834 = vmatpush1.msra.mxu0 0.0
      %1835 = vmatprep.subr.mxu0 0.0
      %1836 = vmatpush1.msra.mxu0 0.0
      %1837 = vmatprep.subr.mxu0 0.0
      %1838 = vmatpush1.msra.mxu0 0.0
      %1839 = vmatprep.subr.mxu0 0.0
      %1840 = vmatpush1.msra.mxu0 0.0
      %1841 = vmatprep.subr.mxu0 0.0
      %1842 = vmatpush1.msra.mxu0 0.0
      %1843 = vmatprep.mubr.f32.mxu0 0.0
      %1844 = vmatmul.mubr.f32.gmra.mrb[0].mxu0 %v1777
      %v1845 = vpop.f32.mrb[0].mxu0
      %v1846 = vadd.f32 0.0, %v1845
      %v1847 = vpop.f32.mrb[0].mxu0
      %1848 = vdwg.mxu0
      %v1849 = vadd.f32 %v1772, %v1846
      %s1850 = scalar_lea.vmem %s9, 64
      %v1851 = vld [vmem:[%s1850] sm:$0xff]
      %v1852 = vld [vmem:[%s1850 + $0x8] sm:$0xff]
      %v1853 = vrot.slane %v1542, 4
      %v1854 = vsel %vm1551, %v1853, 0
      %1856 = vmatprep.subr.mxu0 0.0
      %1857 = vmatpush1.msra.mxu0 %v1851
      %1858 = vmatprep.subr.mxu0 0.0
      %1859 = vmatpush1.msra.mxu0 %v1852
      %1860 = vmatprep.subr.mxu0 0.0
      %1861 = vmatpush1.msra.mxu0 0.0
      %1862 = vmatprep.subr.mxu0 0.0
      %1863 = vmatpush1.msra.mxu0 0.0
      %1864 = vmatprep.subr.mxu0 0.0
      %1865 = vmatpush1.msra.mxu0 0.0
      %1866 = vmatprep.subr.mxu0 0.0
      %1867 = vmatpush1.msra.mxu0 0.0
      %1868 = vmatprep.subr.mxu0 0.0
      %1869 = vmatpush1.msra.mxu0 0.0
      %1870 = vmatprep.subr.mxu0 0.0
      %1871 = vmatpush1.msra.mxu0 0.0
      %1872 = vmatprep.subr.mxu0 0.0
      %1873 = vmatpush1.msra.mxu0 0.0
      %1874 = vmatprep.subr.mxu0 0.0
      %1875 = vmatpush1.msra.mxu0 0.0
      %1876 = vmatprep.subr.mxu0 0.0
      %1877 = vmatpush1.msra.mxu0 0.0
      %1878 = vmatprep.subr.mxu0 0.0
      %1879 = vmatpush1.msra.mxu0 0.0
      %1880 = vmatprep.subr.mxu0 0.0
      %1881 = vmatpush1.msra.mxu0 0.0
      %1882 = vmatprep.subr.mxu0 0.0
      %1883 = vmatpush1.msra.mxu0 0.0
      %1884 = vmatprep.subr.mxu0 0.0
      %1885 = vmatpush1.msra.mxu0 0.0
      %1886 = vmatprep.subr.mxu0 0.0
      %1887 = vmatpush1.msra.mxu0 0.0
      %1888 = vmatprep.subr.mxu0 0.0
      %1889 = vmatpush1.msra.mxu0 0.0
      %1890 = vmatprep.subr.mxu0 0.0
      %1891 = vmatpush1.msra.mxu0 0.0
      %1892 = vmatprep.subr.mxu0 0.0
      %1893 = vmatpush1.msra.mxu0 0.0
      %1894 = vmatprep.subr.mxu0 0.0
      %1895 = vmatpush1.msra.mxu0 0.0
      %1896 = vmatprep.subr.mxu0 0.0
      %1897 = vmatpush1.msra.mxu0 0.0
      %1898 = vmatprep.subr.mxu0 0.0
      %1899 = vmatpush1.msra.mxu0 0.0
      %1900 = vmatprep.subr.mxu0 0.0
      %1901 = vmatpush1.msra.mxu0 0.0
      %1902 = vmatprep.subr.mxu0 0.0
      %1903 = vmatpush1.msra.mxu0 0.0
      %1904 = vmatprep.subr.mxu0 0.0
      %1905 = vmatpush1.msra.mxu0 0.0
      %1906 = vmatprep.subr.mxu0 0.0
      %1907 = vmatpush1.msra.mxu0 0.0
      %1908 = vmatprep.subr.mxu0 0.0
      %1909 = vmatpush1.msra.mxu0 0.0
      %1910 = vmatprep.subr.mxu0 0.0
      %1911 = vmatpush1.msra.mxu0 0.0
      %1912 = vmatprep.subr.mxu0 0.0
      %1913 = vmatpush1.msra.mxu0 0.0
      %1914 = vmatprep.subr.mxu0 0.0
      %1915 = vmatpush1.msra.mxu0 0.0
      %1916 = vmatprep.subr.mxu0 0.0
      %1917 = vmatpush1.msra.mxu0 0.0
      %1918 = vmatprep.subr.mxu0 0.0
      %1919 = vmatpush1.msra.mxu0 0.0
      %1920 = vmatprep.mubr.f32.mxu0 0.0
      %1921 = vmatmul.mubr.f32.gmra.mrb[0].mxu0 %v1854
      %v1922 = vpop.f32.mrb[0].mxu0
      %v1923 = vadd.f32 0.0, %v1922
      %v1924 = vpop.f32.mrb[0].mxu0
      %1925 = vdwg.mxu0
      %v1926 = vadd.f32 %v1849, %v1923
      %s1927 = scalar_lea.vmem %s9, 80
      %v1928 = vld [vmem:[%s1927] sm:$0xff]
      %v1929 = vld [vmem:[%s1927 + $0x8] sm:$0xff]
      %v1930 = vrot.slane %v1542, 5
      %v1931 = vsel %vm1551, %v1930, 0
      %1933 = vmatprep.subr.mxu0 0.0
      %1934 = vmatpush1.msra.mxu0 %v1928
      %1935 = vmatprep.subr.mxu0 0.0
      %1936 = vmatpush1.msra.mxu0 %v1929
      %1937 = vmatprep.subr.mxu0 0.0
      %1938 = vmatpush1.msra.mxu0 0.0
      %1939 = vmatprep.subr.mxu0 0.0
      %1940 = vmatpush1.msra.mxu0 0.0
      %1941 = vmatprep.subr.mxu0 0.0
      %1942 = vmatpush1.msra.mxu0 0.0
      %1943 = vmatprep.subr.mxu0 0.0
      %1944 = vmatpush1.msra.mxu0 0.0
      %1945 = vmatprep.subr.mxu0 0.0
      %1946 = vmatpush1.msra.mxu0 0.0
      %1947 = vmatprep.subr.mxu0 0.0
      %1948 = vmatpush1.msra.mxu0 0.0
      %1949 = vmatprep.subr.mxu0 0.0
      %1950 = vmatpush1.msra.mxu0 0.0
      %1951 = vmatprep.subr.mxu0 0.0
      %1952 = vmatpush1.msra.mxu0 0.0
      %1953 = vmatprep.subr.mxu0 0.0
      %1954 = vmatpush1.msra.mxu0 0.0
      %1955 = vmatprep.subr.mxu0 0.0
      %1956 = vmatpush1.msra.mxu0 0.0
      %1957 = vmatprep.subr.mxu0 0.0
      %1958 = vmatpush1.msra.mxu0 0.0
      %1959 = vmatprep.subr.mxu0 0.0
      %1960 = vmatpush1.msra.mxu0 0.0
      %1961 = vmatprep.subr.mxu0 0.0
      %1962 = vmatpush1.msra.mxu0 0.0
      %1963 = vmatprep.subr.mxu0 0.0
      %1964 = vmatpush1.msra.mxu0 0.0
      %1965 = vmatprep.subr.mxu0 0.0
      %1966 = vmatpush1.msra.mxu0 0.0
      %1967 = vmatprep.subr.mxu0 0.0
      %1968 = vmatpush1.msra.mxu0 0.0
      %1969 = vmatprep.subr.mxu0 0.0
      %1970 = vmatpush1.msra.mxu0 0.0
      %1971 = vmatprep.subr.mxu0 0.0
      %1972 = vmatpush1.msra.mxu0 0.0
      %1973 = vmatprep.subr.mxu0 0.0
      %1974 = vmatpush1.msra.mxu0 0.0
      %1975 = vmatprep.subr.mxu0 0.0
      %1976 = vmatpush1.msra.mxu0 0.0
      %1977 = vmatprep.subr.mxu0 0.0
      %1978 = vmatpush1.msra.mxu0 0.0
      %1979 = vmatprep.subr.mxu0 0.0
      %1980 = vmatpush1.msra.mxu0 0.0
      %1981 = vmatprep.subr.mxu0 0.0
      %1982 = vmatpush1.msra.mxu0 0.0
      %1983 = vmatprep.subr.mxu0 0.0
      %1984 = vmatpush1.msra.mxu0 0.0
      %1985 = vmatprep.subr.mxu0 0.0
      %1986 = vmatpush1.msra.mxu0 0.0
      %1987 = vmatprep.subr.mxu0 0.0
      %1988 = vmatpush1.msra.mxu0 0.0
      %1989 = vmatprep.subr.mxu0 0.0
      %1990 = vmatpush1.msra.mxu0 0.0
      %1991 = vmatprep.subr.mxu0 0.0
      %1992 = vmatpush1.msra.mxu0 0.0
      %1993 = vmatprep.subr.mxu0 0.0
      %1994 = vmatpush1.msra.mxu0 0.0
      %1995 = vmatprep.subr.mxu0 0.0
      %1996 = vmatpush1.msra.mxu0 0.0
      %1997 = vmatprep.mubr.f32.mxu0 0.0
      %1998 = vmatmul.mubr.f32.gmra.mrb[0].mxu0 %v1931
      %v1999 = vpop.f32.mrb[0].mxu0
      %v2000 = vadd.f32 0.0, %v1999
      %v2001 = vpop.f32.mrb[0].mxu0
      %2002 = vdwg.mxu0
      %v2003 = vadd.f32 %v1926, %v2000
      %s2004 = scalar_lea.vmem %s9, 96
      %v2005 = vld [vmem:[%s2004] sm:$0xff]
      %v2006 = vld [vmem:[%s2004 + $0x8] sm:$0xff]
      %v2007 = vrot.slane %v1542, 6
      %v2008 = vsel %vm1551, %v2007, 0
      %2010 = vmatprep.subr.mxu0 0.0
      %2011 = vmatpush1.msra.mxu0 %v2005
      %2012 = vmatprep.subr.mxu0 0.0
      %2013 = vmatpush1.msra.mxu0 %v2006
      %2014 = vmatprep.subr.mxu0 0.0
      %2015 = vmatpush1.msra.mxu0 0.0
      %2016 = vmatprep.subr.mxu0 0.0
      %2017 = vmatpush1.msra.mxu0 0.0
      %2018 = vmatprep.subr.mxu0 0.0
      %2019 = vmatpush1.msra.mxu0 0.0
      %2020 = vmatprep.subr.mxu0 0.0
      %2021 = vmatpush1.msra.mxu0 0.0
      %2022 = vmatprep.subr.mxu0 0.0
      %2023 = vmatpush1.msra.mxu0 0.0
      %2024 = vmatprep.subr.mxu0 0.0
      %2025 = vmatpush1.msra.mxu0 0.0
      %2026 = vmatprep.subr.mxu0 0.0
      %2027 = vmatpush1.msra.mxu0 0.0
      %2028 = vmatprep.subr.mxu0 0.0
      %2029 = vmatpush1.msra.mxu0 0.0
      %2030 = vmatprep.subr.mxu0 0.0
      %2031 = vmatpush1.msra.mxu0 0.0
      %2032 = vmatprep.subr.mxu0 0.0
      %2033 = vmatpush1.msra.mxu0 0.0
      %2034 = vmatprep.subr.mxu0 0.0
      %2035 = vmatpush1.msra.mxu0 0.0
      %2036 = vmatprep.subr.mxu0 0.0
      %2037 = vmatpush1.msra.mxu0 0.0
      %2038 = vmatprep.subr.mxu0 0.0
      %2039 = vmatpush1.msra.mxu0 0.0
      %2040 = vmatprep.subr.mxu0 0.0
      %2041 = vmatpush1.msra.mxu0 0.0
      %2042 = vmatprep.subr.mxu0 0.0
      %2043 = vmatpush1.msra.mxu0 0.0
      %2044 = vmatprep.subr.mxu0 0.0
      %2045 = vmatpush1.msra.mxu0 0.0
      %2046 = vmatprep.subr.mxu0 0.0
      %2047 = vmatpush1.msra.mxu0 0.0
      %2048 = vmatprep.subr.mxu0 0.0
      %2049 = vmatpush1.msra.mxu0 0.0
      %2050 = vmatprep.subr.mxu0 0.0
      %2051 = vmatpush1.msra.mxu0 0.0
      %2052 = vmatprep.subr.mxu0 0.0
      %2053 = vmatpush1.msra.mxu0 0.0
      %2054 = vmatprep.subr.mxu0 0.0
      %2055 = vmatpush1.msra.mxu0 0.0
      %2056 = vmatprep.subr.mxu0 0.0
      %2057 = vmatpush1.msra.mxu0 0.0
      %2058 = vmatprep.subr.mxu0 0.0
      %2059 = vmatpush1.msra.mxu0 0.0
      %2060 = vmatprep.subr.mxu0 0.0
      %2061 = vmatpush1.msra.mxu0 0.0
      %2062 = vmatprep.subr.mxu0 0.0
      %2063 = vmatpush1.msra.mxu0 0.0
      %2064 = vmatprep.subr.mxu0 0.0
      %2065 = vmatpush1.msra.mxu0 0.0
      %2066 = vmatprep.subr.mxu0 0.0
      %2067 = vmatpush1.msra.mxu0 0.0
      %2068 = vmatprep.subr.mxu0 0.0
      %2069 = vmatpush1.msra.mxu0 0.0
      %2070 = vmatprep.subr.mxu0 0.0
      %2071 = vmatpush1.msra.mxu0 0.0
      %2072 = vmatprep.subr.mxu0 0.0
      %2073 = vmatpush1.msra.mxu0 0.0
      %2074 = vmatprep.mubr.f32.mxu0 0.0
      %2075 = vmatmul.mubr.f32.gmra.mrb[0].mxu0 %v2008
      %v2076 = vpop.f32.mrb[0].mxu0
      %v2077 = vadd.f32 0.0, %v2076
      %v2078 = vpop.f32.mrb[0].mxu0
      %2079 = vdwg.mxu0
      %v2080 = vadd.f32 %v2003, %v2077
      %s2081 = scalar_lea.vmem %s9, 112
      %v2082 = vld [vmem:[%s2081] sm:$0xff]
      %v2083 = vld [vmem:[%s2081 + $0x8] sm:$0xff]
      %v2084 = vrot.slane %v1542, 7
      %v2085 = vsel %vm1551, %v2084, 0
      %2087 = vmatprep.subr.mxu0 0.0
      %2088 = vmatpush1.msra.mxu0 %v2082
      %2089 = vmatprep.subr.mxu0 0.0
      %2090 = vmatpush1.msra.mxu0 %v2083
      %2091 = vmatprep.subr.mxu0 0.0
      %2092 = vmatpush1.msra.mxu0 0.0
      %2093 = vmatprep.subr.mxu0 0.0
      %2094 = vmatpush1.msra.mxu0 0.0
      %2095 = vmatprep.subr.mxu0 0.0
      %2096 = vmatpush1.msra.mxu0 0.0
      %2097 = vmatprep.subr.mxu0 0.0
      %2098 = vmatpush1.msra.mxu0 0.0
      %2099 = vmatprep.subr.mxu0 0.0
      %2100 = vmatpush1.msra.mxu0 0.0
      %2101 = vmatprep.subr.mxu0 0.0
      %2102 = vmatpush1.msra.mxu0 0.0
      %2103 = vmatprep.subr.mxu0 0.0
      %2104 = vmatpush1.msra.mxu0 0.0
      %2105 = vmatprep.subr.mxu0 0.0
      %2106 = vmatpush1.msra.mxu0 0.0
      %2107 = vmatprep.subr.mxu0 0.0
      %2108 = vmatpush1.msra.mxu0 0.0
      %2109 = vmatprep.subr.mxu0 0.0
      %2110 = vmatpush1.msra.mxu0 0.0
      %2111 = vmatprep.subr.mxu0 0.0
      %2112 = vmatpush1.msra.mxu0 0.0
      %2113 = vmatprep.subr.mxu0 0.0
      %2114 = vmatpush1.msra.mxu0 0.0
      %2115 = vmatprep.subr.mxu0 0.0
      %2116 = vmatpush1.msra.mxu0 0.0
      %2117 = vmatprep.subr.mxu0 0.0
      %2118 = vmatpush1.msra.mxu0 0.0
      %2119 = vmatprep.subr.mxu0 0.0
      %2120 = vmatpush1.msra.mxu0 0.0
      %2121 = vmatprep.subr.mxu0 0.0
      %2122 = vmatpush1.msra.mxu0 0.0
      %2123 = vmatprep.subr.mxu0 0.0
      %2124 = vmatpush1.msra.mxu0 0.0
      %2125 = vmatprep.subr.mxu0 0.0
      %2126 = vmatpush1.msra.mxu0 0.0
      %2127 = vmatprep.subr.mxu0 0.0
      %2128 = vmatpush1.msra.mxu0 0.0
      %2129 = vmatprep.subr.mxu0 0.0
      %2130 = vmatpush1.msra.mxu0 0.0
      %2131 = vmatprep.subr.mxu0 0.0
      %2132 = vmatpush1.msra.mxu0 0.0
      %2133 = vmatprep.subr.mxu0 0.0
      %2134 = vmatpush1.msra.mxu0 0.0
      %2135 = vmatprep.subr.mxu0 0.0
      %2136 = vmatpush1.msra.mxu0 0.0
      %2137 = vmatprep.subr.mxu0 0.0
      %2138 = vmatpush1.msra.mxu0 0.0
      %2139 = vmatprep.subr.mxu0 0.0
      %2140 = vmatpush1.msra.mxu0 0.0
      %2141 = vmatprep.subr.mxu0 0.0
      %2142 = vmatpush1.msra.mxu0 0.0
      %2143 = vmatprep.subr.mxu0 0.0
      %2144 = vmatpush1.msra.mxu0 0.0
      %2145 = vmatprep.subr.mxu0 0.0
      %2146 = vmatpush1.msra.mxu0 0.0
      %2147 = vmatprep.subr.mxu0 0.0
      %2148 = vmatpush1.msra.mxu0 0.0
      %2149 = vmatprep.subr.mxu0 0.0
      %2150 = vmatpush1.msra.mxu0 0.0
      %2151 = vmatprep.mubr.f32.mxu0 0.0
      %2152 = vmatmul.mubr.f32.gmra.mrb[0].mxu0 %v2085
      %v2153 = vpop.f32.mrb[0].mxu0
      %v2154 = vadd.f32 0.0, %v2153
      %v2155 = vpop.f32.mrb[0].mxu0
      %2156 = vdwg.mxu0
      %v2157 = vadd.f32 %v2080, %v2154
      %s2158 = scalar_lea.vmem %s9, 128
      %v2159 = vld [vmem:[%s2158] sm:$0xff]
      %v2160 = vld [vmem:[%s2158 + $0x8] sm:$0xff]
      %v2162 = vsel %vm1551, %v1543, 0
      %2164 = vmatprep.subr.mxu0 0.0
      %2165 = vmatpush1.msra.mxu0 %v2159
      %2166 = vmatprep.subr.mxu0 0.0
      %2167 = vmatpush1.msra.mxu0 %v2160
      %2168 = vmatprep.subr.mxu0 0.0
      %2169 = vmatpush1.msra.mxu0 0.0
      %2170 = vmatprep.subr.mxu0 0.0
      %2171 = vmatpush1.msra.mxu0 0.0
      %2172 = vmatprep.subr.mxu0 0.0
      %2173 = vmatpush1.msra.mxu0 0.0
      %2174 = vmatprep.subr.mxu0 0.0
      %2175 = vmatpush1.msra.mxu0 0.0
      %2176 = vmatprep.subr.mxu0 0.0
      %2177 = vmatpush1.msra.mxu0 0.0
      %2178 = vmatprep.subr.mxu0 0.0
      %2179 = vmatpush1.msra.mxu0 0.0
      %2180 = vmatprep.subr.mxu0 0.0
      %2181 = vmatpush1.msra.mxu0 0.0
      %2182 = vmatprep.subr.mxu0 0.0
      %2183 = vmatpush1.msra.mxu0 0.0
      %2184 = vmatprep.subr.mxu0 0.0
      %2185 = vmatpush1.msra.mxu0 0.0
      %2186 = vmatprep.subr.mxu0 0.0
      %2187 = vmatpush1.msra.mxu0 0.0
      %2188 = vmatprep.subr.mxu0 0.0
      %2189 = vmatpush1.msra.mxu0 0.0
      %2190 = vmatprep.subr.mxu0 0.0
      %2191 = vmatpush1.msra.mxu0 0.0
      %2192 = vmatprep.subr.mxu0 0.0
      %2193 = vmatpush1.msra.mxu0 0.0
      %2194 = vmatprep.subr.mxu0 0.0
      %2195 = vmatpush1.msra.mxu0 0.0
      %2196 = vmatprep.subr.mxu0 0.0
      %2197 = vmatpush1.msra.mxu0 0.0
      %2198 = vmatprep.subr.mxu0 0.0
      %2199 = vmatpush1.msra.mxu0 0.0
      %2200 = vmatprep.subr.mxu0 0.0
      %2201 = vmatpush1.msra.mxu0 0.0
      %2202 = vmatprep.subr.mxu0 0.0
      %2203 = vmatpush1.msra.mxu0 0.0
      %2204 = vmatprep.subr.mxu0 0.0
      %2205 = vmatpush1.msra.mxu0 0.0
      %2206 = vmatprep.subr.mxu0 0.0
      %2207 = vmatpush1.msra.mxu0 0.0
      %2208 = vmatprep.subr.mxu0 0.0
      %2209 = vmatpush1.msra.mxu0 0.0
      %2210 = vmatprep.subr.mxu0 0.0
      %2211 = vmatpush1.msra.mxu0 0.0
      %2212 = vmatprep.subr.mxu0 0.0
      %2213 = vmatpush1.msra.mxu0 0.0
      %2214 = vmatprep.subr.mxu0 0.0
      %2215 = vmatpush1.msra.mxu0 0.0
      %2216 = vmatprep.subr.mxu0 0.0
      %2217 = vmatpush1.msra.mxu0 0.0
      %2218 = vmatprep.subr.mxu0 0.0
      %2219 = vmatpush1.msra.mxu0 0.0
      %2220 = vmatprep.subr.mxu0 0.0
      %2221 = vmatpush1.msra.mxu0 0.0
      %2222 = vmatprep.subr.mxu0 0.0
      %2223 = vmatpush1.msra.mxu0 0.0
      %2224 = vmatprep.subr.mxu0 0.0
      %2225 = vmatpush1.msra.mxu0 0.0
      %2226 = vmatprep.subr.mxu0 0.0
      %2227 = vmatpush1.msra.mxu0 0.0
      %2228 = vmatprep.mubr.f32.mxu0 0.0
      %2229 = vmatmul.mubr.f32.gmra.mrb[0].mxu0 %v2162
      %v2230 = vpop.f32.mrb[0].mxu0
      %v2231 = vadd.f32 0.0, %v2230
      %v2232 = vpop.f32.mrb[0].mxu0
      %2233 = vdwg.mxu0
      %v2234 = vadd.f32 %v2157, %v2231
      %v2235 = vadd.f32 %v2234, %v450
      %v2236 = vmax.f32 %v2235, 0.0
      %v2237 = vmul.f32 %v2236, %v451
      %vm2238 = vcmask 516096
      %v2239 = vsel %vm2238, %v2237, 0.0
      %2240 = vadd.xlane.f32.xlu0 %v2239
      %v2241 = vpop.xlane.xlu0 %2240
      %v2242 = vadd.f32 %v2241, %v452
      %vm2243 = vcmask 0
      %2244 = vst.msk [vmem:[%s438] sm:$0x1] %vm2243, %v2242
      %p2245 = scmp.lt.s32.totalorder %s26, 1
      %s2246 = scalar_select %p2245, %s26, 1
      %s2247 = scalar_lea.vmem %s13, %s2246
      // Predicated region
      $region73: #{sac_value_forward_pallas.1} parent=71 // pred_check
        %p2248 = pneg %p322
      $region74: #{sac_value_forward_pallas.1} parent=71 // pred_check_branch
        %2250 = sbr.rel (%p2248) target = $region76
      $region75: #{sac_value_forward_pallas.1} parent=71 // pred_region
        _
      $region76: #{sac_value_forward_pallas.1} parent=71 // pred_fallthru
        _
    $region72: #{sac_value_forward_pallas.1} parent=5 // pred_fallthru
      _
    %p2251 = scmp.le.s32.totalorder 2, %s21
    // Predicated region
    $region77: #{sac_value_forward_pallas.1} parent=5 // pred_check
      %p2252 = pneg %p2251
    $region78: #{sac_value_forward_pallas.1} parent=5 // pred_check_branch
      %2254 = sbr.rel (%p2252) target = $region80
    $region79: #{sac_value_forward_pallas.1} parent=5 // pred_region
      %s2255 = ssub.s32 %s21, 2
      // Predicated region
      $region81: #{sac_value_forward_pallas.1} parent=79 // pred_check
        %p2256 = pneg %p328
      $region82: #{sac_value_forward_pallas.1} parent=79 // pred_check_branch
        %2258 = sbr.rel (%p2256) target = $region84
      $region83: #{sac_value_forward_pallas.1} parent=79 // pred_region
        %p2259 = scmp.lt.s32.totalorder %s27, 1
        %s2260 = scalar_select %p2259, %s27, 1
        %s2261 = scalar_lea.vmem %s13, %s2260
      $region84: #{sac_value_forward_pallas.1} parent=79 // pred_fallthru
        _
    $region80: #{sac_value_forward_pallas.1} parent=5 // pred_fallthru
      _
  $region6: #{sac_value_forward_pallas.1} parent=0 // loop_footer
    %s25 = sadd.s32 1, %s21
  $region7: #{sac_value_forward_pallas.1} parent=0 // loop_footer_branch
    %20 = sbr.rel target = $region3
  $region8: #{sac_value_forward_pallas.1} parent=0 // loop_exit
    _

</llo_original>
